<compile_context>
chip_gen: v5e
topology: v5e:2x2
jax: 0.10.0
libtpu: 0.0.40
codegen_flags: <defaults>
</compile_context>

<pallas_src>
import functools

import jax
import jax.numpy as jnp
from jax.experimental import pallas as pl
from jax.experimental.pallas import tpu as pltpu

MIN_NORM = 1e-15      # clamp_min used by the reference Poincare-ball math
BALL_EPS = 1e-3       # float32 boundary epsilon used by project()


def _round_up(n, m):
    return ((n + m - 1) // m) * m


# --------------------------------------------------------------------------- #
# Kernel bodies
# --------------------------------------------------------------------------- #
def _hyp_epilogue(mx, x_sq, bm, y2, o_ref, c):
    """f32 hyperbolic epilogue on the accumulated matmul result.

    mx   : (TB, out_pad) f32  -- W @ x for the *unprojected* x. project(x) is a
                                 per-row scale and mobius_matvec is linear in x,
                                 so the scale is folded into per-row factors only.
    x_sq : (TB, 1) f32        -- ||x||^2 of the unprojected input rows.
    bm   : (1, out_pad) f32   -- expmap0(bias) (or None).
    y2   : f32 scalar         -- ||bm||^2 (or None), hoisted to the wrapper (SMEM).
    """
    c = jnp.float32(c)
    sqrt_c = jnp.sqrt(c)
    maxnorm = (1.0 - BALL_EPS) / sqrt_c

    # project(x): per-row scale only; never applied to the full-width tensor.
    x_norm_raw = jnp.maximum(jnp.sqrt(x_sq), MIN_NORM)
    scale_in = jnp.minimum(1.0, maxnorm * pl.reciprocal(x_norm_raw, approx=False))
    x_norm = jnp.minimum(x_norm_raw, maxnorm)             # ||project(x)||

    # mobius_matvec gain.  ||W project(x)|| = scale_in * ||W x||.
    mx_sq = jnp.sum(mx * mx, axis=-1, keepdims=True)       # (TB, 1)
    mx_norm = jnp.maximum(scale_in * jnp.sqrt(mx_sq), MIN_NORM)
    z = jnp.clip(sqrt_c * x_norm, -1.0 + 1e-7, 1.0 - 1e-7)
    artanh = 0.5 * jnp.log((1.0 + z) / (1.0 - z))
    ratio = mx_norm * pl.reciprocal(x_norm, approx=False)
    gain = jnp.tanh(ratio * artanh) * pl.reciprocal(sqrt_c * mx_norm, approx=False)
    gain = gain * scale_in                                  # out == gain * mx
    gain = jnp.where(mx_sq <= 0.0, 0.0, gain)               # Mx == 0 rows -> origin

    if bm is None:
        # project(gain * mx): all scalars folded into one per-row store factor.
        o_sq = gain * gain * mx_sq
        o_norm = jnp.maximum(jnp.sqrt(o_sq), MIN_NORM)
        scale_out = jnp.minimum(1.0, maxnorm * pl.reciprocal(o_norm, approx=False))
        o_ref[...] = (mx * (gain * scale_out)).astype(o_ref.dtype)
        return

    # mobius_add(gain*mx, bm): per-row scalars everywhere except the <mx,bm>
    # reduction and a single fused (num -> store) full-width pass.
    x2 = gain * gain * mx_sq                                # ||out||^2, no extra reduce
    xy = gain * jnp.sum(mx * bm, axis=-1, keepdims=True)    # <out, bm>
    two_cxy = 2.0 * c * xy
    coef_mx = (1.0 + two_cxy + c * y2) * gain               # multiplies mx
    coef_b = 1.0 - c * x2                                   # multiplies bm
    den = 1.0 + two_cxy + (c * c) * x2 * y2
    inv_den = pl.reciprocal(jnp.maximum(den, MIN_NORM), approx=False)
    num = coef_mx * mx + coef_b * bm                        # (TB, out_pad)

    # final projection: ||num * inv_den||^2 == sum(num^2) * inv_den^2
    o_sq = jnp.sum(num * num, axis=-1, keepdims=True) * (inv_den * inv_den)
    o_norm = jnp.maximum(jnp.sqrt(o_sq), MIN_NORM)
    scale_out = jnp.minimum(1.0, maxnorm * pl.reciprocal(o_norm, approx=False))
    o_ref[...] = (num * (inv_den * scale_out)).astype(o_ref.dtype)


def _hyp_linear_kernel_resident(x_ref, w_ref, *rest, c, use_bias):
    """grid=(B/TB,): single matmul per batch tile, weight stays VMEM-resident."""
    if use_bias:
        bm_ref, y2_ref, o_ref = rest
    else:
        (o_ref,) = rest
    xf = x_ref[...].astype(jnp.float32)
    x_sq = jnp.sum(xf * xf, axis=-1, keepdims=True)
    mx = jnp.dot(x_ref[...], w_ref[...], preferred_element_type=jnp.float32)
    if use_bias:
        _hyp_epilogue(mx, x_sq, bm_ref[...], y2_ref[0, 0], o_ref, c)
    else:
        _hyp_epilogue(mx, x_sq, None, None, o_ref, c)


def _hyp_linear_kernel_ktiled(x_ref, w_ref, *rest, c, use_bias):
    """grid=(B/TB, K/TK): weight streamed along K; epilogue on the last K step."""
    if use_bias:
        bm_ref, y2_ref, o_ref, acc_ref, xsq_ref = rest
    else:
        o_ref, acc_ref, xsq_ref = rest

    k = pl.program_id(1)
    nk = pl.num_programs(1)

    xf = x_ref[...].astype(jnp.float32)
    xs = jnp.sum(xf * xf, axis=-1, keepdims=True)
    part = jnp.dot(x_ref[...], w_ref[...], preferred_element_type=jnp.float32)

    @pl.when(k == 0)
    def _():
        acc_ref[...] = part
        xsq_ref[...] = xs

    @pl.when(k > 0)
    def _():
        acc_ref[...] += part
        xsq_ref[...] += xs

    @pl.when(k == nk - 1)
    def _():
        if use_bias:
            _hyp_epilogue(acc_ref[...], xsq_ref[...], bm_ref[...], y2_ref[0, 0],
                          o_ref, c)
        else:
            _hyp_epilogue(acc_ref[...], xsq_ref[...], None, None, o_ref, c)


# --------------------------------------------------------------------------- #
# Wrapper
# --------------------------------------------------------------------------- #
def prepare_hyp_linear_params(weight, bias=None, *, curvature=1.0,
                              compute_dtype=jnp.bfloat16):
    """One-time (cacheable) parameter prep, hoisted out of the per-call path:
    weight transpose/cast/pad, expmap0(bias) and ||expmap0(bias)||^2."""
    out_f, in_f = weight.shape
    in_pad = _round_up(in_f, 128)
    out_pad = _round_up(out_f, 128)
    wt = jnp.pad(weight.astype(compute_dtype).T,
                 ((0, in_pad - in_f), (0, out_pad - out_f)))      # (in_pad, out_pad)
    bias_m = None
    y2 = None
    if bias is not None:
        c32 = jnp.float32(curvature)
        sqrt_c = jnp.sqrt(c32)
        b32 = bias.astype(jnp.float32).reshape(1, out_f)
        b_norm = jnp.maximum(
            jnp.sqrt(jnp.sum(b32 * b32, axis=-1, keepdims=True)), MIN_NORM)
        bias_m = jnp.tanh(sqrt_c * b_norm) * b32 / (sqrt_c * b_norm)   # expmap0(bias)
        bias_m = jnp.pad(bias_m, ((0, 0), (0, out_pad - out_f)))       # (1, out_pad) f32
        y2 = jnp.sum(bias_m * bias_m, axis=-1, keepdims=True)          # (1, 1) f32 (SMEM)
    return dict(wt=wt, bias_m=bias_m, y2=y2,
                in_features=in_f, out_features=out_f,
                in_pad=in_pad, out_pad=out_pad,
                compute_dtype=compute_dtype, curvature=float(curvature))


def hyp_linear(x, weight=None, bias=None, *, curvature=1.0,
               compute_dtype=jnp.bfloat16, tile_b=256, tile_k=None,
               out_dtype=jnp.float32, params=None, force_ktiled=False):
    """Pallas HypLinear forward. x: (B, in_f). Pass (weight[, bias]) directly, or a
    cached `params` dict from prepare_hyp_linear_params() to skip per-call prep."""
    if params is None:
        params = prepare_hyp_linear_params(weight, bias, curvature=curvature,
                                           compute_dtype=compute_dtype)
    curvature = params["curvature"]
    compute_dtype = params["compute_dtype"]
    wt = params["wt"]
    bias_m = params["bias_m"]
    y2 = params["y2"]
    in_f = params["in_features"]
    out_f = params["out_features"]
    in_pad = params["in_pad"]
    out_pad = params["out_pad"]
    use_bias = bias_m is not None

    B, in_f_x = x.shape
    assert in_f_x == in_f, "x feature dim must match weight in_features"

    itemsize = jnp.dtype(compute_dtype).itemsize
    out_itemsize = jnp.dtype(out_dtype).itemsize

    # Physical per-TensorCore VMEM (default scoped limits differ per chip: v5e 16 MiB,
    # v6e/v7x 32 MiB), so vmem_limit_bytes is always set explicitly below.
    try:
        phys_vmem = int(pltpu.get_tpu_info().vmem_capacity_bytes)
    except Exception:
        phys_vmem = 64 << 20          # conservative fallback: v7x per-TC VMEM
    budget = phys_vmem * 3 // 4

    # Batch tile: multiple of 16 (bf16 sublane packing). v6e can use tile_b=512;
    # v5e prefers 128-256 (single vst slot).
    tile_b = _round_up(max(16, min(int(tile_b), _round_up(B, 16))), 16)
    b_pad = _round_up(B, tile_b)
    grid_b = b_pad // tile_b

    bias_bytes = (out_pad * 4) if use_bias else 0
    epi_bytes = 2 * tile_b * out_pad * 4 + (2 << 20)       # f32 mx/num temps + headroom

    resident_need = (in_pad * out_pad * itemsize            # weight, single-buffered
                     + bias_bytes
                     + 2 * tile_b * (in_pad * itemsize + out_pad * out_itemsize)
                     + epi_bytes)

    def _ktiled_need(tk_):
        return (2 * (tk_ * out_pad * itemsize + tile_b * tk_ * itemsize)   # streamed W + x
                + tile_b * out_pad * 4 + tile_b * 4                        # acc + xsq scratch
                + 2 * tile_b * out_pad * out_itemsize                      # out tiles
                + bias_bytes + epi_bytes)

    use_ktiled = force_ktiled or (resident_need > budget)

    if use_ktiled:
        if tile_k is None:
            tk = in_pad
            while tk > 128 and _ktiled_need(tk) > budget:
                tk = _round_up(tk // 2, 128)
        else:
            tk = _round_up(min(int(tile_k), in_pad), 128)
        # TODO(synk): if even tile_k=128 overflows VMEM (huge out_features), an extra
        # "parallel" grid axis over out_pad is needed (also helps small-B v7x shapes).
        if in_pad % tk != 0:
            in_pad_new = _round_up(in_pad, tk)
            wt = jnp.pad(wt, ((0, in_pad_new - in_pad), (0, 0)))
            in_pad = in_pad_new
        nk = in_pad // tk
        vmem_need = _ktiled_need(tk)
    else:
        tk = in_pad
        nk = 1
        vmem_need = resident_need

    xp = jnp.pad(x.astype(compute_dtype), ((0, b_pad - B), (0, in_pad - in_f)))

    operands = [xp, wt]
    if use_bias:
        operands += [bias_m, y2]

    cost = pl.CostEstimate(
        flops=int(2 * b_pad * in_pad * out_pad),
        transcendentals=int(4 * b_pad),
        bytes_accessed=int(xp.size * itemsize + wt.size * itemsize
                           + (bias_m.size * 4 if use_bias else 0)
                           + b_pad * out_pad * out_itemsize),
    )
    compiler_params = pltpu.CompilerParams(
        dimension_semantics=(("parallel", "arbitrary") if use_ktiled else ("parallel",)),
        vmem_limit_bytes=int(min(max(vmem_need + (4 << 20), 32 << 20),
                                 int(phys_vmem * 0.9))),
    )

    def _call(single_buffer_consts):
        # Constant-index (resident) operands only need one buffer; double-buffering
        # them just wastes VMEM.
        pmode = ({"pipeline_mode": pl.Buffered(buffer_count=1)}
                 if single_buffer_consts else {})
        if use_ktiled:
            in_specs = [
                pl.BlockSpec((tile_b, tk), lambda i, k: (i, k)),
                pl.BlockSpec((tk, out_pad), lambda i, k: (k, 0)),     # streamed along K
            ]
            if use_bias:
                in_specs += [
                    pl.BlockSpec((1, out_pad), lambda i, k: (0, 0), **pmode),
                    pl.BlockSpec(memory_space=pltpu.MemorySpace.SMEM),  # y2 scalar
                ]
            out_specs = pl.BlockSpec((tile_b, out_pad), lambda i, k: (i, 0))
            scratch = [pltpu.VMEM((tile_b, out_pad), jnp.float32),
                       pltpu.VMEM((tile_b, 1), jnp.float32)]
            grid = (grid_b, nk)
            kernel = functools.partial(_hyp_linear_kernel_ktiled,
                                       c=curvature, use_bias=use_bias)
        else:
            in_specs = [
                pl.BlockSpec((tile_b, in_pad), lambda i: (i, 0)),
                pl.BlockSpec((in_pad, out_pad), lambda i: (0, 0), **pmode),  # resident
            ]
            if use_bias:
                in_specs += [
                    pl.BlockSpec((1, out_pad), lambda i: (0, 0), **pmode),
                    pl.BlockSpec(memory_space=pltpu.MemorySpace.SMEM),       # y2 scalar
                ]
            out_specs = pl.BlockSpec((tile_b, out_pad), lambda i: (i, 0))
            scratch = []
            grid = (grid_b,)
            kernel = functools.partial(_hyp_linear_kernel_resident,
                                       c=curvature, use_bias=use_bias)
        return pl.pallas_call(
            kernel,
            out_shape=jax.ShapeDtypeStruct((b_pad, out_pad), out_dtype),
            grid=grid,
            in_specs=in_specs,
            out_specs=out_specs,
            scratch_shapes=scratch,
            compiler_params=compiler_params,
            cost_estimate=cost,
        )(*operands)

    try:
        y_pad = _call(True)
    except Exception:
        # Fallback for JAX versions rejecting pipeline_mode=pl.Buffered(1); only
        # costs extra VMEM buffers for the constant operands.
        y_pad = _call(False)
    return y_pad[:B, :out_f]


# --------------------------------------------------------------------------- #
# Pure-JAX reference of the module forward
# --------------------------------------------------------------------------- #
def _reference(x, weight, bias, c=1.0, quantize=True):
    """quantize=True mirrors the bf16 operand feed of the kernel."""
    c = jnp.float32(c)
    sqrt_c = jnp.sqrt(c)
    if quantize:
        x = x.astype(jnp.bfloat16).astype(jnp.float32)
        weight = weight.astype(jnp.bfloat16).astype(jnp.float32)

    def l2norm(v):
        return jnp.maximum(jnp.linalg.norm(v, axis=-1, keepdims=True), MIN_NORM)

    def artanh(z):
        z = jnp.clip(z, -1.0 + 1e-7, 1.0 - 1e-7)
        return 0.5 * jnp.log((1.0 + z) / (1.0 - z))

    def project(v):
        n = l2norm(v)
        m = (1.0 - BALL_EPS) / sqrt_c
        return jnp.where(n > m, v / n * m, v)

    x = project(x)
    xn = l2norm(x)
    mx = jnp.dot(x, weight.T, precision=jax.lax.Precision.HIGHEST)
    mxn = l2norm(mx)
    res = jnp.tanh(mxn / xn * artanh(sqrt_c * xn)) * mx / (mxn * sqrt_c)
    res = jnp.where(jnp.all(mx == 0.0, axis=-1, keepdims=True), 0.0, res)
    if bias is not None:
        b = bias[None, :].astype(jnp.float32)
        bn = l2norm(b)
        bm = jnp.tanh(sqrt_c * bn) * b / (sqrt_c * bn)
        x2 = jnp.sum(res * res, -1, keepdims=True)
        y2 = jnp.sum(bm * bm, -1, keepdims=True)
        xy = jnp.sum(res * bm, -1, keepdims=True)
        num = (1.0 + 2.0 * c * xy + c * y2) * res + (1.0 - c * x2) * bm
        den = 1.0 + 2.0 * c * xy + c * c * x2 * y2
        res = num / jnp.maximum(den, MIN_NORM)
    return project(res)


if __name__ == "__main__":
    key = jax.random.PRNGKey(0)
    k_x, k_w, k_b, k_x2, k_w2 = jax.random.split(key, 5)

    # ---- primary test: HypLinear(32 -> 16), batch 8, with bias (resident path) ----
    batch, in_features, out_features = 8, 32, 16
    curvature = 1.0

    x = 0.1 * jax.random.normal(k_x, (batch, in_features), dtype=jnp.float32)
    bound = 1.0 / jnp.sqrt(jnp.float32(in_features))
    weight = jax.random.uniform(k_w, (out_features, in_features),
                                minval=-bound, maxval=bound, dtype=jnp.float32)
    bias = jax.random.uniform(k_b, (out_features,),
                              minval=-bound, maxval=bound, dtype=jnp.float32)

    params = prepare_hyp_linear_params(weight, bias, curvature=curvature)  # cacheable
    y = jax.block_until_ready(hyp_linear(x, params=params, curvature=curvature))

    y_ref_q = _reference(x, weight, bias, curvature, quantize=True)
    y_ref_f = _reference(x, weight, bias, curvature, quantize=False)
    assert y.shape == (batch, out_features)
    assert bool(jnp.all(jnp.isfinite(y)))
    assert bool(jnp.allclose(y, y_ref_q, atol=1e-4, rtol=1e-4)), \
        float(jnp.max(jnp.abs(y - y_ref_q)))
    assert bool(jnp.allclose(y, y_ref_f, atol=5e-3, rtol=5e-3)), \
        float(jnp.max(jnp.abs(y - y_ref_f)))

    # ---- no-bias path (un-prepared convenience API) ----
    y_nb = jax.block_until_ready(hyp_linear(x, weight, None, curvature=curvature))
    y_nb_ref = _reference(x, weight, None, curvature, quantize=True)
    assert bool(jnp.allclose(y_nb, y_nb_ref, atol=1e-4, rtol=1e-4)), \
        float(jnp.max(jnp.abs(y_nb - y_nb_ref)))

    # ---- K-tiled (streamed-weight) path, forced at a small shape to exercise it ----
    in2, out2 = 160, 24
    x_kt = 0.1 * jax.random.normal(k_x2, (batch, in2), dtype=jnp.float32)
    bound2 = 1.0 / jnp.sqrt(jnp.float32(in2))
    w_kt = jax.random.uniform(k_w2, (out2, in2), minval=-bound2, maxval=bound2,
                              dtype=jnp.float32)
    y_kt = jax.block_until_ready(
        hyp_linear(x_kt, w_kt, None, curvature=curvature,
                   force_ktiled=True, tile_k=128))
    y_kt_ref = _reference(x_kt, w_kt, None, curvature, quantize=True)
    assert y_kt.shape == (batch, out2)
    assert bool(jnp.allclose(y_kt, y_kt_ref, atol=1e-4, rtol=1e-4)), \
        float(jnp.max(jnp.abs(y_kt - y_kt_ref)))

    print("KERNEL_OK")
</pallas_src>

<mosaic_0001>
module attributes {stable_mosaic.version = 11 : i64} {
  func.func @_hyp_linear_kernel_resident(%arg0: i32, %arg1: memref<16x128xbf16, #tpu.memory_space<vmem>>, %arg2: memref<128x128xbf16, #tpu.memory_space<vmem>>, %arg3: memref<1x128xf32, #tpu.memory_space<vmem>>, %arg4: memref<1x1xf32, #tpu.memory_space<smem>>, %arg5: memref<16x128xf32, #tpu.memory_space<vmem>>) attributes {dimension_semantics = [#tpu.dimension_semantics<parallel>], iteration_bounds = array<i64: 1>, scalar_prefetch = 0 : i64, scratch_operands = 0 : i64, tpu.core_type = #tpu.core_type<tc>, window_params = [{transform_indices = @transform_0, window_bounds = array<i64: 16, 128>}, {pipeline_mode = #tpu.pipeline_mode<synchronous>, transform_indices = @transform_1, window_bounds = array<i64: 128, 128>}, {pipeline_mode = #tpu.pipeline_mode<synchronous>, transform_indices = @transform_2, window_bounds = array<i64: 1, 128>}, {transform_indices = @transform_3, window_bounds = array<i64: 1, 1>}, {transform_indices = @transform_4, window_bounds = array<i64: 16, 128>}]} {
    %c0 = arith.constant 0 : index
    %c0_0 = arith.constant 0 : index
    %0 = vector.load %arg1[%c0, %c0_0] : memref<16x128xbf16, #tpu.memory_space<vmem>>, vector<16x128xbf16>
    %1 = arith.extf %0 : vector<16x128xbf16> to vector<16x128xf32>
    %2 = arith.mulf %1, %1 : vector<16x128xf32>
    %cst = arith.constant dense<0.000000e+00> : vector<16xf32>
    %3 = vector.multi_reduction <add>, %2, %cst [1] : vector<16x128xf32> to vector<16xf32>
    %4 = vector.shape_cast %3 : vector<16xf32> to vector<16x1xf32>
    %c0_1 = arith.constant 0 : index
    %c0_2 = arith.constant 0 : index
    %5 = vector.load %arg1[%c0_1, %c0_2] : memref<16x128xbf16, #tpu.memory_space<vmem>>, vector<16x128xbf16>
    %c0_3 = arith.constant 0 : index
    %c0_4 = arith.constant 0 : index
    %6 = vector.load %arg2[%c0_3, %c0_4] : memref<128x128xbf16, #tpu.memory_space<vmem>>, vector<128x128xbf16>
    %cst_5 = arith.constant dense<0.000000e+00> : vector<16x128xf32>
    %7 = tpu.matmul %5, %6, %cst_5 {dimension_numbers = #tpu.dot_dimension_numbers<[1], [0], [0], [1], [0, 0, 1, 1], [], []>} : vector<16x128xbf16>, vector<128x128xbf16>, vector<16x128xf32> -> vector<16x128xf32>
    %c0_6 = arith.constant 0 : index
    %c0_7 = arith.constant 0 : index
    %8 = vector.load %arg3[%c0_6, %c0_7] : memref<1x128xf32, #tpu.memory_space<vmem>>, vector<1x128xf32>
    %c0_8 = arith.constant 0 : index
    %c0_9 = arith.constant 0 : index
    %9 = memref.load %arg4[%c0_8, %c0_9] : memref<1x1xf32, #tpu.memory_space<smem>>
    %cst_10 = arith.constant 1.000000e+00 : f32
    %10 = math.sqrt %cst_10 : f32
    %cst_11 = arith.constant 9.990000e-01 : f32
    %11 = arith.divf %cst_11, %10 : f32
    %12 = math.sqrt %4 : vector<16x1xf32>
    %cst_12 = arith.constant 1.000000e-15 : f32
    %13 = vector.broadcast %cst_12 : f32 to vector<16x1xf32>
    %14 = arith.maximumf %12, %13 : vector<16x1xf32>
    %15 = tpu.reciprocal %14 : vector<16x1xf32> -> vector<16x1xf32>
    %16 = vector.broadcast %11 : f32 to vector<16x1xf32>
    %17 = arith.mulf %16, %15 : vector<16x1xf32>
    %cst_13 = arith.constant 1.000000e+00 : f32
    %18 = vector.broadcast %cst_13 : f32 to vector<16x1xf32>
    %19 = arith.minimumf %18, %17 : vector<16x1xf32>
    %20 = vector.broadcast %11 : f32 to vector<16x1xf32>
    %21 = arith.minimumf %14, %20 : vector<16x1xf32>
    %22 = arith.mulf %7, %7 : vector<16x128xf32>
    %cst_14 = arith.constant dense<0.000000e+00> : vector<16xf32>
    %23 = vector.multi_reduction <add>, %22, %cst_14 [1] : vector<16x128xf32> to vector<16xf32>
    %24 = vector.shape_cast %23 : vector<16xf32> to vector<16x1xf32>
    %25 = math.sqrt %24 : vector<16x1xf32>
    %26 = arith.mulf %19, %25 : vector<16x1xf32>
    %cst_15 = arith.constant 1.000000e-15 : f32
    %27 = vector.broadcast %cst_15 : f32 to vector<16x1xf32>
    %28 = arith.maximumf %26, %27 : vector<16x1xf32>
    %29 = vector.broadcast %10 : f32 to vector<16x1xf32>
    %30 = arith.mulf %29, %21 : vector<16x1xf32>
    %cst_16 = arith.constant -0.99999988 : f32
    %cst_17 = arith.constant 0.99999988 : f32
    %31 = vector.broadcast %cst_16 : f32 to vector<16x1xf32>
    %32 = arith.maximumf %31, %30 : vector<16x1xf32>
    %33 = vector.broadcast %cst_17 : f32 to vector<16x1xf32>
    %34 = arith.minimumf %33, %32 : vector<16x1xf32>
    %cst_18 = arith.constant 1.000000e+00 : f32
    %35 = vector.broadcast %cst_18 : f32 to vector<16x1xf32>
    %36 = arith.addf %35, %34 : vector<16x1xf32>
    %cst_19 = arith.constant 1.000000e+00 : f32
    %37 = vector.broadcast %cst_19 : f32 to vector<16x1xf32>
    %38 = arith.subf %37, %34 : vector<16x1xf32>
    %39 = arith.divf %36, %38 : vector<16x1xf32>
    %40 = math.log %39 : vector<16x1xf32>
    %cst_20 = arith.constant 5.000000e-01 : f32
    %41 = vector.broadcast %cst_20 : f32 to vector<16x1xf32>
    %42 = arith.mulf %41, %40 : vector<16x1xf32>
    %43 = tpu.reciprocal %21 : vector<16x1xf32> -> vector<16x1xf32>
    %44 = arith.mulf %28, %43 : vector<16x1xf32>
    %45 = arith.mulf %44, %42 : vector<16x1xf32>
    %46 = math.tanh %45 : vector<16x1xf32>
    %47 = vector.broadcast %10 : f32 to vector<16x1xf32>
    %48 = arith.mulf %47, %28 : vector<16x1xf32>
    %49 = tpu.reciprocal %48 : vector<16x1xf32> -> vector<16x1xf32>
    %50 = arith.mulf %46, %49 : vector<16x1xf32>
    %51 = arith.mulf %50, %19 : vector<16x1xf32>
    %cst_21 = arith.constant 0.000000e+00 : f32
    %52 = vector.broadcast %cst_21 : f32 to vector<16x1xf32>
    %53 = arith.cmpf ole, %24, %52 : vector<16x1xf32>
    %cst_22 = arith.constant 0.000000e+00 : f32
    %54 = vector.broadcast %cst_22 : f32 to vector<16x1xf32>
    %55 = arith.select %53, %54, %51 : vector<16x1xi1>, vector<16x1xf32>
    %56 = arith.mulf %55, %55 : vector<16x1xf32>
    %57 = arith.mulf %56, %24 : vector<16x1xf32>
    %58 = vector.broadcast %8 : vector<1x128xf32> to vector<16x128xf32>
    %59 = arith.mulf %7, %58 : vector<16x128xf32>
    %cst_23 = arith.constant dense<0.000000e+00> : vector<16xf32>
    %60 = vector.multi_reduction <add>, %59, %cst_23 [1] : vector<16x128xf32> to vector<16xf32>
    %61 = vector.shape_cast %60 : vector<16xf32> to vector<16x1xf32>
    %62 = arith.mulf %55, %61 : vector<16x1xf32>
    %cst_24 = arith.constant 2.000000e+00 : f32
    %cst_25 = arith.constant 1.000000e+00 : f32
    %63 = arith.mulf %cst_24, %cst_25 : f32
    %64 = vector.broadcast %63 : f32 to vector<16x1xf32>
    %65 = arith.mulf %64, %62 : vector<16x1xf32>
    %cst_26 = arith.constant 1.000000e+00 : f32
    %66 = vector.broadcast %cst_26 : f32 to vector<16x1xf32>
    %67 = arith.addf %66, %65 : vector<16x1xf32>
    %cst_27 = arith.constant 1.000000e+00 : f32
    %68 = arith.mulf %cst_27, %9 : f32
    %69 = vector.broadcast %68 : f32 to vector<16x1xf32>
    %70 = arith.addf %67, %69 : vector<16x1xf32>
    %71 = arith.mulf %70, %55 : vector<16x1xf32>
    %cst_28 = arith.constant 1.000000e+00 : f32
    %72 = vector.broadcast %cst_28 : f32 to vector<16x1xf32>
    %73 = arith.mulf %72, %57 : vector<16x1xf32>
    %cst_29 = arith.constant 1.000000e+00 : f32
    %74 = vector.broadcast %cst_29 : f32 to vector<16x1xf32>
    %75 = arith.subf %74, %73 : vector<16x1xf32>
    %cst_30 = arith.constant 1.000000e+00 : f32
    %76 = vector.broadcast %cst_30 : f32 to vector<16x1xf32>
    %77 = arith.addf %76, %65 : vector<16x1xf32>
    %cst_31 = arith.constant 1.000000e+00 : f32
    %cst_32 = arith.constant 1.000000e+00 : f32
    %78 = arith.mulf %cst_31, %cst_32 : f32
    %79 = vector.broadcast %78 : f32 to vector<16x1xf32>
    %80 = arith.mulf %79, %57 : vector<16x1xf32>
    %81 = vector.broadcast %9 : f32 to vector<16x1xf32>
    %82 = arith.mulf %80, %81 : vector<16x1xf32>
    %83 = arith.addf %77, %82 : vector<16x1xf32>
    %cst_33 = arith.constant 1.000000e-15 : f32
    %84 = vector.broadcast %cst_33 : f32 to vector<16x1xf32>
    %85 = arith.maximumf %83, %84 : vector<16x1xf32>
    %86 = tpu.reciprocal %85 : vector<16x1xf32> -> vector<16x1xf32>
    %87 = vector.broadcast %71 : vector<16x1xf32> to vector<16x128xf32>
    %88 = arith.mulf %87, %7 : vector<16x128xf32>
    %89 = vector.broadcast %75 : vector<16x1xf32> to vector<16x128xf32>
    %90 = vector.broadcast %8 : vector<1x128xf32> to vector<16x128xf32>
    %91 = arith.mulf %89, %90 : vector<16x128xf32>
    %92 = arith.addf %88, %91 : vector<16x128xf32>
    %93 = arith.mulf %92, %92 : vector<16x128xf32>
    %cst_34 = arith.constant dense<0.000000e+00> : vector<16xf32>
    %94 = vector.multi_reduction <add>, %93, %cst_34 [1] : vector<16x128xf32> to vector<16xf32>
    %95 = vector.shape_cast %94 : vector<16xf32> to vector<16x1xf32>
    %96 = arith.mulf %86, %86 : vector<16x1xf32>
    %97 = arith.mulf %95, %96 : vector<16x1xf32>
    %98 = math.sqrt %97 : vector<16x1xf32>
    %cst_35 = arith.constant 1.000000e-15 : f32
    %99 = vector.broadcast %cst_35 : f32 to vector<16x1xf32>
    %100 = arith.maximumf %98, %99 : vector<16x1xf32>
    %101 = tpu.reciprocal %100 : vector<16x1xf32> -> vector<16x1xf32>
    %102 = vector.broadcast %11 : f32 to vector<16x1xf32>
    %103 = arith.mulf %102, %101 : vector<16x1xf32>
    %cst_36 = arith.constant 1.000000e+00 : f32
    %104 = vector.broadcast %cst_36 : f32 to vector<16x1xf32>
    %105 = arith.minimumf %104, %103 : vector<16x1xf32>
    %106 = arith.mulf %86, %105 : vector<16x1xf32>
    %107 = vector.broadcast %106 : vector<16x1xf32> to vector<16x128xf32>
    %108 = arith.mulf %92, %107 : vector<16x128xf32>
    %c0_37 = arith.constant 0 : index
    %c0_38 = arith.constant 0 : index
    %109 = vector.load %arg5[%c0_37, %c0_38] : memref<16x128xf32, #tpu.memory_space<vmem>>, vector<16x128xf32>
    tpu.vector_store %arg5[%c0_37, %c0_38], %108 {strides = array<i32>} : memref<16x128xf32, #tpu.memory_space<vmem>>, vector<16x128xf32>,
    return
  }
  func.func @transform_0(%arg0: i32) -> (i32, i32) {
    %c0_i32 = arith.constant 0 : i32
    %c0_i32_0 = arith.constant 0 : i32
    return %arg0, %c0_i32 : i32, i32
  }
  func.func @transform_1(%arg0: i32) -> (i32, i32) {
    %c0_i32 = arith.constant 0 : i32
    %c0_i32_0 = arith.constant 0 : i32
    %c0_i32_1 = arith.constant 0 : i32
    return %c0_i32, %c0_i32_0 : i32, i32
  }
  func.func @transform_2(%arg0: i32) -> (i32, i32) {
    %c0_i32 = arith.constant 0 : i32
    %c0_i32_0 = arith.constant 0 : i32
    %c0_i32_1 = arith.constant 0 : i32
    return %c0_i32, %c0_i32_0 : i32, i32
  }
  func.func @transform_3(%arg0: i32) -> (i32, i32) {
    %c0_i32 = arith.constant 0 : i32
    %c0_i32_0 = arith.constant 0 : i32
    %c0_i32_1 = arith.constant 0 : i32
    return %c0_i32, %c0_i32_0 : i32, i32
  }
  func.func @transform_4(%arg0: i32) -> (i32, i32) {
    %c0_i32 = arith.constant 0 : i32
    %c0_i32_0 = arith.constant 0 : i32
    return %arg0, %c0_i32 : i32, i32
  }
}

module attributes {stable_mosaic.version = 11 : i64} {
  func.func @_hyp_linear_kernel_resident(%arg0: i32, %arg1: memref<16x128xbf16, #tpu.memory_space<vmem>>, %arg2: memref<128x128xbf16, #tpu.memory_space<vmem>>, %arg3: memref<1x128xf32, #tpu.memory_space<vmem>>, %arg4: memref<1x1xf32, #tpu.memory_space<smem>>, %arg5: memref<16x128xf32, #tpu.memory_space<vmem>>) attributes {dimension_semantics = [#tpu.dimension_semantics<parallel>], iteration_bounds = array<i64: 1>, scalar_prefetch = 0 : i64, scratch_operands = 0 : i64, tpu.core_type = #tpu.core_type<tc>, window_params = [{transform_indices = @transform_0, window_bounds = array<i64: 16, 128>}, {pipeline_mode = #tpu.pipeline_mode<synchronous>, transform_indices = @transform_1, window_bounds = array<i64: 128, 128>}, {pipeline_mode = #tpu.pipeline_mode<synchronous>, transform_indices = @transform_2, window_bounds = array<i64: 1, 128>}, {transform_indices = @transform_3, window_bounds = array<i64: 1, 1>}, {transform_indices = @transform_4, window_bounds = array<i64: 16, 128>}]} {
    %c0 = arith.constant 0 : index
    %c0_0 = arith.constant 0 : index
    %0 = vector.load %arg1[%c0, %c0_0] : memref<16x128xbf16, #tpu.memory_space<vmem>>, vector<16x128xbf16>
    %1 = arith.extf %0 : vector<16x128xbf16> to vector<16x128xf32>
    %2 = arith.mulf %1, %1 : vector<16x128xf32>
    %cst = arith.constant dense<0.000000e+00> : vector<16xf32>
    %3 = vector.multi_reduction <add>, %2, %cst [1] : vector<16x128xf32> to vector<16xf32>
    %4 = vector.shape_cast %3 : vector<16xf32> to vector<16x1xf32>
    %c0_1 = arith.constant 0 : index
    %c0_2 = arith.constant 0 : index
    %5 = vector.load %arg1[%c0_1, %c0_2] : memref<16x128xbf16, #tpu.memory_space<vmem>>, vector<16x128xbf16>
    %c0_3 = arith.constant 0 : index
    %c0_4 = arith.constant 0 : index
    %6 = vector.load %arg2[%c0_3, %c0_4] : memref<128x128xbf16, #tpu.memory_space<vmem>>, vector<128x128xbf16>
    %cst_5 = arith.constant dense<0.000000e+00> : vector<16x128xf32>
    %7 = tpu.matmul %5, %6, %cst_5 {dimension_numbers = #tpu.dot_dimension_numbers<[1], [0], [0], [1], [0, 0, 1, 1], [], []>} : vector<16x128xbf16>, vector<128x128xbf16>, vector<16x128xf32> -> vector<16x128xf32>
    %c0_6 = arith.constant 0 : index
    %c0_7 = arith.constant 0 : index
    %8 = vector.load %arg3[%c0_6, %c0_7] : memref<1x128xf32, #tpu.memory_space<vmem>>, vector<1x128xf32>
    %c0_8 = arith.constant 0 : index
    %c0_9 = arith.constant 0 : index
    %9 = memref.load %arg4[%c0_8, %c0_9] : memref<1x1xf32, #tpu.memory_space<smem>>
    %cst_10 = arith.constant 1.000000e+00 : f32
    %10 = math.sqrt %cst_10 : f32
    %cst_11 = arith.constant 9.990000e-01 : f32
    %11 = arith.divf %cst_11, %10 : f32
    %12 = math.sqrt %4 : vector<16x1xf32>
    %cst_12 = arith.constant 1.000000e-15 : f32
    %13 = vector.broadcast %cst_12 : f32 to vector<16x1xf32>
    %14 = arith.maximumf %12, %13 : vector<16x1xf32>
    %15 = tpu.reciprocal %14 : vector<16x1xf32> -> vector<16x1xf32>
    %16 = vector.broadcast %11 : f32 to vector<16x1xf32>
    %17 = arith.mulf %16, %15 : vector<16x1xf32>
    %cst_13 = arith.constant 1.000000e+00 : f32
    %18 = vector.broadcast %cst_13 : f32 to vector<16x1xf32>
    %19 = arith.minimumf %18, %17 : vector<16x1xf32>
    %20 = vector.broadcast %11 : f32 to vector<16x1xf32>
    %21 = arith.minimumf %14, %20 : vector<16x1xf32>
    %22 = arith.mulf %7, %7 : vector<16x128xf32>
    %cst_14 = arith.constant dense<0.000000e+00> : vector<16xf32>
    %23 = vector.multi_reduction <add>, %22, %cst_14 [1] : vector<16x128xf32> to vector<16xf32>
    %24 = vector.shape_cast %23 : vector<16xf32> to vector<16x1xf32>
    %25 = math.sqrt %24 : vector<16x1xf32>
    %26 = arith.mulf %19, %25 : vector<16x1xf32>
    %cst_15 = arith.constant 1.000000e-15 : f32
    %27 = vector.broadcast %cst_15 : f32 to vector<16x1xf32>
    %28 = arith.maximumf %26, %27 : vector<16x1xf32>
    %29 = vector.broadcast %10 : f32 to vector<16x1xf32>
    %30 = arith.mulf %29, %21 : vector<16x1xf32>
    %cst_16 = arith.constant -0.99999988 : f32
    %cst_17 = arith.constant 0.99999988 : f32
    %31 = vector.broadcast %cst_16 : f32 to vector<16x1xf32>
    %32 = arith.maximumf %31, %30 : vector<16x1xf32>
    %33 = vector.broadcast %cst_17 : f32 to vector<16x1xf32>
    %34 = arith.minimumf %33, %32 : vector<16x1xf32>
    %cst_18 = arith.constant 1.000000e+00 : f32
    %35 = vector.broadcast %cst_18 : f32 to vector<16x1xf32>
    %36 = arith.addf %35, %34 : vector<16x1xf32>
    %cst_19 = arith.constant 1.000000e+00 : f32
    %37 = vector.broadcast %cst_19 : f32 to vector<16x1xf32>
    %38 = arith.subf %37, %34 : vector<16x1xf32>
    %39 = arith.divf %36, %38 : vector<16x1xf32>
    %40 = math.log %39 : vector<16x1xf32>
    %cst_20 = arith.constant 5.000000e-01 : f32
    %41 = vector.broadcast %cst_20 : f32 to vector<16x1xf32>
    %42 = arith.mulf %41, %40 : vector<16x1xf32>
    %43 = tpu.reciprocal %21 : vector<16x1xf32> -> vector<16x1xf32>
    %44 = arith.mulf %28, %43 : vector<16x1xf32>
    %45 = arith.mulf %44, %42 : vector<16x1xf32>
    %46 = math.tanh %45 : vector<16x1xf32>
    %47 = vector.broadcast %10 : f32 to vector<16x1xf32>
    %48 = arith.mulf %47, %28 : vector<16x1xf32>
    %49 = tpu.reciprocal %48 : vector<16x1xf32> -> vector<16x1xf32>
    %50 = arith.mulf %46, %49 : vector<16x1xf32>
    %51 = arith.mulf %50, %19 : vector<16x1xf32>
    %cst_21 = arith.constant 0.000000e+00 : f32
    %52 = vector.broadcast %cst_21 : f32 to vector<16x1xf32>
    %53 = arith.cmpf ole, %24, %52 : vector<16x1xf32>
    %cst_22 = arith.constant 0.000000e+00 : f32
    %54 = vector.broadcast %cst_22 : f32 to vector<16x1xf32>
    %55 = arith.select %53, %54, %51 : vector<16x1xi1>, vector<16x1xf32>
    %56 = arith.mulf %55, %55 : vector<16x1xf32>
    %57 = arith.mulf %56, %24 : vector<16x1xf32>
    %58 = vector.broadcast %8 : vector<1x128xf32> to vector<16x128xf32>
    %59 = arith.mulf %7, %58 : vector<16x128xf32>
    %cst_23 = arith.constant dense<0.000000e+00> : vector<16xf32>
    %60 = vector.multi_reduction <add>, %59, %cst_23 [1] : vector<16x128xf32> to vector<16xf32>
    %61 = vector.shape_cast %60 : vector<16xf32> to vector<16x1xf32>
    %62 = arith.mulf %55, %61 : vector<16x1xf32>
    %cst_24 = arith.constant 2.000000e+00 : f32
    %cst_25 = arith.constant 1.000000e+00 : f32
    %63 = arith.mulf %cst_24, %cst_25 : f32
    %64 = vector.broadcast %63 : f32 to vector<16x1xf32>
    %65 = arith.mulf %64, %62 : vector<16x1xf32>
    %cst_26 = arith.constant 1.000000e+00 : f32
    %66 = vector.broadcast %cst_26 : f32 to vector<16x1xf32>
    %67 = arith.addf %66, %65 : vector<16x1xf32>
    %cst_27 = arith.constant 1.000000e+00 : f32
    %68 = arith.mulf %cst_27, %9 : f32
    %69 = vector.broadcast %68 : f32 to vector<16x1xf32>
    %70 = arith.addf %67, %69 : vector<16x1xf32>
    %71 = arith.mulf %70, %55 : vector<16x1xf32>
    %cst_28 = arith.constant 1.000000e+00 : f32
    %72 = vector.broadcast %cst_28 : f32 to vector<16x1xf32>
    %73 = arith.mulf %72, %57 : vector<16x1xf32>
    %cst_29 = arith.constant 1.000000e+00 : f32
    %74 = vector.broadcast %cst_29 : f32 to vector<16x1xf32>
    %75 = arith.subf %74, %73 : vector<16x1xf32>
    %cst_30 = arith.constant 1.000000e+00 : f32
    %76 = vector.broadcast %cst_30 : f32 to vector<16x1xf32>
    %77 = arith.addf %76, %65 : vector<16x1xf32>
    %cst_31 = arith.constant 1.000000e+00 : f32
    %cst_32 = arith.constant 1.000000e+00 : f32
    %78 = arith.mulf %cst_31, %cst_32 : f32
    %79 = vector.broadcast %78 : f32 to vector<16x1xf32>
    %80 = arith.mulf %79, %57 : vector<16x1xf32>
    %81 = vector.broadcast %9 : f32 to vector<16x1xf32>
    %82 = arith.mulf %80, %81 : vector<16x1xf32>
    %83 = arith.addf %77, %82 : vector<16x1xf32>
    %cst_33 = arith.constant 1.000000e-15 : f32
    %84 = vector.broadcast %cst_33 : f32 to vector<16x1xf32>
    %85 = arith.maximumf %83, %84 : vector<16x1xf32>
    %86 = tpu.reciprocal %85 : vector<16x1xf32> -> vector<16x1xf32>
    %87 = vector.broadcast %71 : vector<16x1xf32> to vector<16x128xf32>
    %88 = arith.mulf %87, %7 : vector<16x128xf32>
    %89 = vector.broadcast %75 : vector<16x1xf32> to vector<16x128xf32>
    %90 = vector.broadcast %8 : vector<1x128xf32> to vector<16x128xf32>
    %91 = arith.mulf %89, %90 : vector<16x128xf32>
    %92 = arith.addf %88, %91 : vector<16x128xf32>
    %93 = arith.mulf %92, %92 : vector<16x128xf32>
    %cst_34 = arith.constant dense<0.000000e+00> : vector<16xf32>
    %94 = vector.multi_reduction <add>, %93, %cst_34 [1] : vector<16x128xf32> to vector<16xf32>
    %95 = vector.shape_cast %94 : vector<16xf32> to vector<16x1xf32>
    %96 = arith.mulf %86, %86 : vector<16x1xf32>
    %97 = arith.mulf %95, %96 : vector<16x1xf32>
    %98 = math.sqrt %97 : vector<16x1xf32>
    %cst_35 = arith.constant 1.000000e-15 : f32
    %99 = vector.broadcast %cst_35 : f32 to vector<16x1xf32>
    %100 = arith.maximumf %98, %99 : vector<16x1xf32>
    %101 = tpu.reciprocal %100 : vector<16x1xf32> -> vector<16x1xf32>
    %102 = vector.broadcast %11 : f32 to vector<16x1xf32>
    %103 = arith.mulf %102, %101 : vector<16x1xf32>
    %cst_36 = arith.constant 1.000000e+00 : f32
    %104 = vector.broadcast %cst_36 : f32 to vector<16x1xf32>
    %105 = arith.minimumf %104, %103 : vector<16x1xf32>
    %106 = arith.mulf %86, %105 : vector<16x1xf32>
    %107 = vector.broadcast %106 : vector<16x1xf32> to vector<16x128xf32>
    %108 = arith.mulf %92, %107 : vector<16x128xf32>
    %c0_37 = arith.constant 0 : index
    %c0_38 = arith.constant 0 : index
    %109 = vector.load %arg5[%c0_37, %c0_38] : memref<16x128xf32, #tpu.memory_space<vmem>>, vector<16x128xf32>
    tpu.vector_store %arg5[%c0_37, %c0_38], %108 {strides = array<i32>} : memref<16x128xf32, #tpu.memory_space<vmem>>, vector<16x128xf32>,
    return
  }
  func.func @transform_0(%arg0: i32) -> (i32, i32) {
    %c0_i32 = arith.constant 0 : i32
    %c0_i32_0 = arith.constant 0 : i32
    return %arg0, %c0_i32 : i32, i32
  }
  func.func @transform_1(%arg0: i32) -> (i32, i32) {
    %c0_i32 = arith.constant 0 : i32
    %c0_i32_0 = arith.constant 0 : i32
    %c0_i32_1 = arith.constant 0 : i32
    return %c0_i32, %c0_i32_0 : i32, i32
  }
  func.func @transform_2(%arg0: i32) -> (i32, i32) {
    %c0_i32 = arith.constant 0 : i32
    %c0_i32_0 = arith.constant 0 : i32
    %c0_i32_1 = arith.constant 0 : i32
    return %c0_i32, %c0_i32_0 : i32, i32
  }
  func.func @transform_3(%arg0: i32) -> (i32, i32) {
    %c0_i32 = arith.constant 0 : i32
    %c0_i32_0 = arith.constant 0 : i32
    %c0_i32_1 = arith.constant 0 : i32
    return %c0_i32, %c0_i32_0 : i32, i32
  }
  func.func @transform_4(%arg0: i32) -> (i32, i32) {
    %c0_i32 = arith.constant 0 : i32
    %c0_i32_0 = arith.constant 0 : i32
    return %arg0, %c0_i32 : i32, i32
  }
}

</mosaic_0001>

<llo_original>
// kernel: tpu_custom_call.1
$region0: #{tpu_custom_call.1}
  #allocation0 [shape = 'u32[]', space=smem, size = 0x4, offset = 0x4, fixed_abs, tag = 'smem constant byte address 0x4 - core index']
  #allocation1 [shape = 'u32[72,128]{1,0:T(1,128)}', space=vmem, size = 0x9000, scoped, tag = 'internal scratch']
  #allocation2 [shape = 'f32[1,1]{1,0:T(1,128)S(6)}', space=smem, size = 0x200, scoped, tag = 'scoped memory for tpu_custom_call.1']
  %s0 = inlined_call_operand.hbm [shape: bf16[16,128], index: 0, kind: input, shape index: {}]
  %s1 = inlined_call_operand.hbm [shape: bf16[128,128], index: 1, kind: input, shape index: {}]
  %s2 = inlined_call_operand.vmem [shape: f32[1,128], index: 2, kind: input, shape index: {}]
  %s3 = inlined_call_operand.<no memory space> [shape: f32[1,1], index: 3, kind: input, shape index: {}]
  %s4 = inlined_call_operand.hbm [shape: f32[16,128], index: 4, kind: output, shape index: {}]
  %s5 = sld [smem:[#allocation0]]
  $region34: #{tpu_custom_call.1} parent=0
    _
  %s7 = ssub.s32 1, %s5
  %s8 = scalar_select 0, %s7, %s5
  %9 = sst [smem:[#allocation2]] %s3
  $region1: #{tpu_custom_call.1} parent=0
    #allocation3 [shape = 'u8[4096]{0}', space=vmem, size = 0x1000, scoped, tag = 'input window, operand 0, single buffered']
    #allocation4 [shape = 's32[1]{0}', space=sflag, size = 0x4, scoped, tag = 'scoped memory for tpu_custom_call.1']
    #allocation5 [shape = 's32[1]{0}', space=sflag, size = 0x4, scoped, tag = 'scoped memory for tpu_custom_call.1']
    #allocation6 [shape = 'u8[32768]{0}', space=vmem, size = 0x8000, scoped, tag = 'input window, operand 1, single buffered']
    #allocation7 [shape = 's32[1]{0}', space=sflag, size = 0x4, scoped, tag = 'scoped memory for tpu_custom_call.1']
    #allocation8 [shape = 'u8[8192]{0}', space=vmem, size = 0x2000, scoped, tag = 'output window, operand 0, single buffered']
    %10 = vsyncpa [#allocation4], 0
    %11 = vsyncpa [#allocation7], 0
    %12 = vsyncpa [#allocation5], 0
    // Predicated region
    $region2: #{tpu_custom_call.1} parent=1 // pred_check
      _
    $region3: #{tpu_custom_call.1} parent=1 // pred_check_branch
      %14 = sbr.rel (0) target = $region5
    $region4: #{tpu_custom_call.1} parent=1 // pred_region
      %16 = vsyncadd [#allocation4], 0
      %s17 = sshll.u32 %s0, 4
      %s18 = int_to_ptr.hbm [resolvable:$true] %s17
      %s19 = sshll.u32 [#allocation3], 4
      %s20 = int_to_ptr.vmem [resolvable:$true] %s19
      %25 = dma.hbm_to_vmem [thread:$0]  %s18, 128, %s20, [#allocation4], 64, 64, 4
    $region5: #{tpu_custom_call.1} parent=1 // pred_fallthru
      _
    // Predicated region
    $region6: #{tpu_custom_call.1} parent=1 // pred_check
      _
    $region7: #{tpu_custom_call.1} parent=1 // pred_check_branch
      %27 = sbr.rel (0) target = $region9
    $region8: #{tpu_custom_call.1} parent=1 // pred_region
      %29 = vsyncadd [#allocation7], 0
      %s30 = sshll.u32 %s1, 4
      %s31 = int_to_ptr.hbm [resolvable:$true] %s30
      %s32 = sshll.u32 [#allocation6], 4
      %s33 = int_to_ptr.vmem [resolvable:$true] %s32
      %38 = dma.hbm_to_vmem [thread:$0]  %s31, 1024, %s33, [#allocation7], 64, 64, 4
    $region9: #{tpu_custom_call.1} parent=1 // pred_fallthru
      _
    // Predicated region
    $region10: #{tpu_custom_call.1} parent=1 // pred_check
      _
    $region11: #{tpu_custom_call.1} parent=1 // pred_check_branch
      %40 = sbr.rel (0) target = $region13
    $region12: #{tpu_custom_call.1} parent=1 // pred_region
      _
    $region13: #{tpu_custom_call.1} parent=1 // pred_fallthru
      _
    // Predicated region
    $region14: #{tpu_custom_call.1} parent=1 // pred_check
      _
    $region15: #{tpu_custom_call.1} parent=1 // pred_check_branch
      %42 = sbr.rel (0) target = $region17
    $region16: #{tpu_custom_call.1} parent=1 // pred_region
      _
    $region17: #{tpu_custom_call.1} parent=1 // pred_fallthru
      _
    // Predicated region
    $region18: #{tpu_custom_call.1} parent=1 // pred_check
      _
    $region19: #{tpu_custom_call.1} parent=1 // pred_check_branch
      %44 = sbr.rel (0) target = $region21
    $region20: #{tpu_custom_call.1} parent=1 // pred_region
      %46 = dma.done [#allocation4], 128
    $region21: #{tpu_custom_call.1} parent=1 // pred_fallthru
      _
    // Predicated region
    $region22: #{tpu_custom_call.1} parent=1 // pred_check
      _
    $region23: #{tpu_custom_call.1} parent=1 // pred_check_branch
      %48 = sbr.rel (0) target = $region25
    $region24: #{tpu_custom_call.1} parent=1 // pred_region
      %50 = dma.done [#allocation7], 1024
    $region25: #{tpu_custom_call.1} parent=1 // pred_fallthru
      _
    %v51 = vld [vmem:[#allocation3] sm:$0xf]
    %v52 = vld [vmem:[#allocation3 + $0x4] sm:$0xf]
    %v53 = vunpack.c.l.bf16 %v51
    %v54 = vunpack.c.l.bf16 %v52
    %v55 = vmul.f32 %v53, %v53
    %v56 = vmul.f32 %v54, %v54
    %57 = vadd.xlane.f32.xlu0 %v55
    %v58 = vpop.xlane.xlu0 %57
    %59 = vadd.xlane.f32.xlu0 %v56
    %v60 = vpop.xlane.xlu0 %59
    %v61 = vld [vmem:[#allocation6] sm:$0xf]
    %v62 = vld [vmem:[#allocation6 + $0x4] sm:$0xf]
    %v63 = vld [vmem:[#allocation6 + $0x8] sm:$0xf]
    %v64 = vld [vmem:[#allocation6 + $0xc] sm:$0xf]
    %v65 = vld [vmem:[#allocation6 + $0x10] sm:$0xf]
    %v66 = vld [vmem:[#allocation6 + $0x14] sm:$0xf]
    %v67 = vld [vmem:[#allocation6 + $0x18] sm:$0xf]
    %v68 = vld [vmem:[#allocation6 + $0x1c] sm:$0xf]
    %v69 = vld [vmem:[#allocation6 + $0x20] sm:$0xf]
    %v70 = vld [vmem:[#allocation6 + $0x24] sm:$0xf]
    %v71 = vld [vmem:[#allocation6 + $0x28] sm:$0xf]
    %v72 = vld [vmem:[#allocation6 + $0x2c] sm:$0xf]
    %v73 = vld [vmem:[#allocation6 + $0x30] sm:$0xf]
    %v74 = vld [vmem:[#allocation6 + $0x34] sm:$0xf]
    %v75 = vld [vmem:[#allocation6 + $0x38] sm:$0xf]
    %v76 = vld [vmem:[#allocation6 + $0x3c] sm:$0xf]
    %v79 = vunpack.c.l.b16 %v51
    %v80 = vunpack.c.l.b16 %v52
    %v81 = vpack.c.b16 %v80, %v79
    %v99 = vunpack.c.l.b16 %v61
    %v100 = vunpack.c.l.b16 %v62
    %v101 = vunpack.c.l.b16 %v63
    %v102 = vunpack.c.l.b16 %v64
    %v103 = vunpack.c.l.b16 %v65
    %v104 = vunpack.c.l.b16 %v66
    %v105 = vunpack.c.l.b16 %v67
    %v106 = vunpack.c.l.b16 %v68
    %v107 = vunpack.c.l.b16 %v69
    %v108 = vunpack.c.l.b16 %v70
    %v109 = vunpack.c.l.b16 %v71
    %v110 = vunpack.c.l.b16 %v72
    %v111 = vunpack.c.l.b16 %v73
    %v112 = vunpack.c.l.b16 %v74
    %v113 = vunpack.c.l.b16 %v75
    %v114 = vunpack.c.l.b16 %v76
    %v115 = vpack.c.b16 %v100, %v99
    %v116 = vpack.c.b16 %v102, %v101
    %v117 = vpack.c.b16 %v104, %v103
    %v118 = vpack.c.b16 %v106, %v105
    %v119 = vpack.c.b16 %v108, %v107
    %v120 = vpack.c.b16 %v110, %v109
    %v121 = vpack.c.b16 %v112, %v111
    %v122 = vpack.c.b16 %v114, %v113
    %131 = vmatpush.bf16.msra.mxu0 %v122
    %132 = vmatpush.bf16.msra.mxu0 %v121
    %133 = vmatpush.bf16.msra.mxu0 %v120
    %134 = vmatpush.bf16.msra.mxu0 %v119
    %135 = vmatpush.bf16.msra.mxu0 %v118
    %136 = vmatpush.bf16.msra.mxu0 %v117
    %137 = vmatpush.bf16.msra.mxu0 %v116
    %138 = vmatpush.bf16.msra.mxu0 %v115
    %139 = vmatmul.bf16.gmra.mxu0 %v81
    %v140 = vpop.f32.mrf.mxu0
    %v141 = vadd.f32 0.0, %v140
    %v142 = vpop.f32.mrf.mxu0
    %v143 = vadd.f32 0.0, %v142
    %144 = vdwg.mxu0
    %v145 = vld [vmem:[%s2] sm:$0x1]
    %s146 = sld [smem:[#allocation2]]
    %v147 = vrsqrt.pop %v58
    %v148 = vmul.f32 %v147, %v58
    %v149 = vmul.f32 %v148, %v147
    %v150 = vmul.f32 0.5, %v149
    %v151 = vsub.f32 1.5, %v150
    %v152 = vmul.f32 %v147, %v151
    %v153 = vmul.f32 %v58, %v152
    %vm154 = vcmp.eq.f32.partialorder %v58, inf
    %v155 = vsel %vm154, %v58, %v153
    %vm156 = vcmp.eq.f32.partialorder %v58, 0.0
    %v157 = vand.u32 %v58, 2147483648
    %v158 = vsel %vm156, %v157, %v155
    %v159 = vrsqrt.pop %v60
    %v160 = vmul.f32 %v159, %v60
    %v161 = vmul.f32 %v160, %v159
    %v162 = vmul.f32 0.5, %v161
    %v163 = vsub.f32 1.5, %v162
    %v164 = vmul.f32 %v159, %v163
    %v165 = vmul.f32 %v60, %v164
    %vm166 = vcmp.eq.f32.partialorder %v60, inf
    %v167 = vsel %vm166, %v60, %v165
    %vm168 = vcmp.eq.f32.partialorder %v60, 0.0
    %v169 = vand.u32 %v60, 2147483648
    %v170 = vsel %vm168, %v169, %v167
    %v171 = vmax.f32 %v158, 1e-15
    %v172 = vmax.f32 %v170, 1e-15
    %v173 = vrcp.pop %v171
    %v174 = vmul.f32 %v171, %v173
    %v175 = vsub.f32 1.0, %v174
    %v176 = vmul.f32 %v173, %v175
    %v177 = vadd.f32 %v173, %v176
    %vm178 = vweird.f32 %v171
    %vm179 = vweird.f32 %v173
    %vm180 = vmor %vm178, %vm179
    %v181 = vsel %vm180, %v173, %v177
    %v182 = vand.u32 2147483647, %v171
    %vm183 = vcmp.eq.f32.partialorder %v182, 8.507059e+37
    %v184 = vand.u32 %v171, 2147483648
    %v185 = vor.u32 1.1754944e-38, %v184
    %v186 = vsel %vm183, %v185, %v181
    %v187 = vrcp.pop %v172
    %v188 = vmul.f32 %v172, %v187
    %v189 = vsub.f32 1.0, %v188
    %v190 = vmul.f32 %v187, %v189
    %v191 = vadd.f32 %v187, %v190
    %vm192 = vweird.f32 %v172
    %vm193 = vweird.f32 %v187
    %vm194 = vmor %vm192, %vm193
    %v195 = vsel %vm194, %v187, %v191
    %v196 = vand.u32 2147483647, %v172
    %vm197 = vcmp.eq.f32.partialorder %v196, 8.507059e+37
    %v198 = vand.u32 %v172, 2147483648
    %v199 = vor.u32 1.1754944e-38, %v198
    %v200 = vsel %vm197, %v199, %v195
    %v201 = vmul.f32 %v186, 0.999
    %v202 = vmul.f32 %v200, 0.999
    %v203 = vmin.f32 %v201, 1.0
    %v204 = vmin.f32 %v202, 1.0
    %v205 = vmin.f32 %v171, 0.999
    %v206 = vmin.f32 %v172, 0.999
    %v207 = vmul.f32 %v141, %v141
    %v208 = vmul.f32 %v143, %v143
    %209 = vadd.xlane.f32.xlu0 %v207
    %v210 = vpop.xlane.xlu0 %209
    %211 = vadd.xlane.f32.xlu0 %v208
    %v212 = vpop.xlane.xlu0 %211
    %v213 = vrsqrt.pop %v210
    %v214 = vmul.f32 %v213, %v210
    %v215 = vmul.f32 %v214, %v213
    %v216 = vmul.f32 0.5, %v215
    %v217 = vsub.f32 1.5, %v216
    %v218 = vmul.f32 %v213, %v217
    %v219 = vmul.f32 %v210, %v218
    %vm220 = vcmp.eq.f32.partialorder %v210, inf
    %v221 = vsel %vm220, %v210, %v219
    %vm222 = vcmp.eq.f32.partialorder %v210, 0.0
    %v223 = vand.u32 %v210, 2147483648
    %v224 = vsel %vm222, %v223, %v221
    %v225 = vrsqrt.pop %v212
    %v226 = vmul.f32 %v225, %v212
    %v227 = vmul.f32 %v226, %v225
    %v228 = vmul.f32 0.5, %v227
    %v229 = vsub.f32 1.5, %v228
    %v230 = vmul.f32 %v225, %v229
    %v231 = vmul.f32 %v212, %v230
    %vm232 = vcmp.eq.f32.partialorder %v212, inf
    %v233 = vsel %vm232, %v212, %v231
    %vm234 = vcmp.eq.f32.partialorder %v212, 0.0
    %v235 = vand.u32 %v212, 2147483648
    %v236 = vsel %vm234, %v235, %v233
    %v237 = vmul.f32 %v203, %v224
    %v238 = vmul.f32 %v204, %v236
    %v239 = vmax.f32 %v237, 1e-15
    %v240 = vmax.f32 %v238, 1e-15
    %v241 = vmax.f32 %v205, -0.9999999
    %v242 = vmax.f32 %v206, -0.9999999
    %v243 = vmin.f32 %v241, 0.9999999
    %v244 = vmin.f32 %v242, 0.9999999
    %v245 = vadd.f32 %v243, 1.0
    %v246 = vadd.f32 %v244, 1.0
    %v247 = vsub.f32 1.0, %v243
    %v248 = vsub.f32 1.0, %v244
    %v249 = vrcp.pop %v247
    %v250 = vmul.f32 %v247, %v249
    %v251 = vsub.f32 1.0, %v250
    %v252 = vmul.f32 %v249, %v251
    %v253 = vadd.f32 %v249, %v252
    %vm254 = vweird.f32 %v247
    %vm255 = vweird.f32 %v249
    %vm256 = vmor %vm254, %vm255
    %v257 = vsel %vm256, %v249, %v253
    %v258 = vand.u32 2147483647, %v247
    %vm259 = vcmp.eq.f32.partialorder %v258, 8.507059e+37
    %v260 = vand.u32 %v247, 2147483648
    %v261 = vor.u32 1.1754944e-38, %v260
    %v262 = vsel %vm259, %v261, %v257
    %v263 = vmul.f32 %v245, %v262
    %v264 = vrcp.pop %v248
    %v265 = vmul.f32 %v248, %v264
    %v266 = vsub.f32 1.0, %v265
    %v267 = vmul.f32 %v264, %v266
    %v268 = vadd.f32 %v264, %v267
    %vm269 = vweird.f32 %v248
    %vm270 = vweird.f32 %v264
    %vm271 = vmor %vm269, %vm270
    %v272 = vsel %vm271, %v264, %v268
    %v273 = vand.u32 2147483647, %v248
    %vm274 = vcmp.eq.f32.partialorder %v273, 8.507059e+37
    %v275 = vand.u32 %v248, 2147483648
    %v276 = vor.u32 1.1754944e-38, %v275
    %v277 = vsel %vm274, %v276, %v272
    %v278 = vmul.f32 %v246, %v277
    %v279 = vlog2.pop %v263
    %v280 = vmul.f32 %v279, 0.6931472
    %v281 = vlog2.pop %v278
    %v282 = vmul.f32 %v281, 0.6931472
    %v283 = vmul.f32 %v280, 0.5
    %v284 = vmul.f32 %v282, 0.5
    %v285 = vrcp.pop %v205
    %v286 = vmul.f32 %v205, %v285
    %v287 = vsub.f32 1.0, %v286
    %v288 = vmul.f32 %v285, %v287
    %v289 = vadd.f32 %v285, %v288
    %vm290 = vweird.f32 %v205
    %vm291 = vweird.f32 %v285
    %vm292 = vmor %vm290, %vm291
    %v293 = vsel %vm292, %v285, %v289
    %v294 = vand.u32 2147483647, %v205
    %vm295 = vcmp.eq.f32.partialorder %v294, 8.507059e+37
    %v296 = vand.u32 %v205, 2147483648
    %v297 = vor.u32 1.1754944e-38, %v296
    %v298 = vsel %vm295, %v297, %v293
    %v299 = vrcp.pop %v206
    %v300 = vmul.f32 %v206, %v299
    %v301 = vsub.f32 1.0, %v300
    %v302 = vmul.f32 %v299, %v301
    %v303 = vadd.f32 %v299, %v302
    %vm304 = vweird.f32 %v206
    %vm305 = vweird.f32 %v299
    %vm306 = vmor %vm304, %vm305
    %v307 = vsel %vm306, %v299, %v303
    %v308 = vand.u32 2147483647, %v206
    %vm309 = vcmp.eq.f32.partialorder %v308, 8.507059e+37
    %v310 = vand.u32 %v206, 2147483648
    %v311 = vor.u32 1.1754944e-38, %v310
    %v312 = vsel %vm309, %v311, %v307
    %v313 = vmul.f32 %v239, %v298
    %v314 = vmul.f32 %v240, %v312
    %v315 = vmul.f32 %v313, %v283
    %v316 = vmul.f32 %v314, %v284
    %v317 = vtanh.pop %v315
    %v318 = vtanh.pop %v316
    %v319 = vrcp.pop %v239
    %v320 = vmul.f32 %v239, %v319
    %v321 = vsub.f32 1.0, %v320
    %v322 = vmul.f32 %v319, %v321
    %v323 = vadd.f32 %v319, %v322
    %vm324 = vweird.f32 %v239
    %vm325 = vweird.f32 %v319
    %vm326 = vmor %vm324, %vm325
    %v327 = vsel %vm326, %v319, %v323
    %v328 = vand.u32 2147483647, %v239
    %vm329 = vcmp.eq.f32.partialorder %v328, 8.507059e+37
    %v330 = vand.u32 %v239, 2147483648
    %v331 = vor.u32 1.1754944e-38, %v330
    %v332 = vsel %vm329, %v331, %v327
    %v333 = vrcp.pop %v240
    %v334 = vmul.f32 %v240, %v333
    %v335 = vsub.f32 1.0, %v334
    %v336 = vmul.f32 %v333, %v335
    %v337 = vadd.f32 %v333, %v336
    %vm338 = vweird.f32 %v240
    %vm339 = vweird.f32 %v333
    %vm340 = vmor %vm338, %vm339
    %v341 = vsel %vm340, %v333, %v337
    %v342 = vand.u32 2147483647, %v240
    %vm343 = vcmp.eq.f32.partialorder %v342, 8.507059e+37
    %v344 = vand.u32 %v240, 2147483648
    %v345 = vor.u32 1.1754944e-38, %v344
    %v346 = vsel %vm343, %v345, %v341
    %v347 = vmul.f32 %v317, %v332
    %v348 = vmul.f32 %v318, %v346
    %v349 = vmul.f32 %v347, %v203
    %v350 = vmul.f32 %v348, %v204
    %vm351 = vcmp.le.f32.partialorder %v210, 0.0
    %vm352 = vcmp.le.f32.partialorder %v212, 0.0
    %v353 = vsel %vm351, 0.0, %v349
    %v354 = vsel %vm352, 0.0, %v350
    %v355 = vmul.f32 %v353, %v353
    %v356 = vmul.f32 %v354, %v354
    %v357 = vmul.f32 %v355, %v210
    %v358 = vmul.f32 %v356, %v212
    %v360 = vperm.slane %v145, 0
    %v362 = vmul.f32 %v141, %v360
    %v363 = vmul.f32 %v143, %v360
    %364 = vadd.xlane.f32.xlu0 %v362
    %v365 = vpop.xlane.xlu0 %364
    %366 = vadd.xlane.f32.xlu0 %v363
    %v367 = vpop.xlane.xlu0 %366
    %v368 = vmul.f32 %v353, %v365
    %v369 = vmul.f32 %v354, %v367
    %v370 = vmul.f32 %v368, 2.0
    %v371 = vmul.f32 %v369, 2.0
    %v372 = vadd.f32 %v370, 1.0
    %v373 = vadd.f32 %v371, 1.0
    %v374 = vstv %s146
    %v375 = vadd.f32 %v372, %v374
    %v376 = vadd.f32 %v373, %v374
    %v377 = vmul.f32 %v375, %v353
    %v378 = vmul.f32 %v376, %v354
    %v379 = vsub.f32 1.0, %v357
    %v380 = vsub.f32 1.0, %v358
    %v381 = vmul.f32 %v357, %v374
    %v382 = vmul.f32 %v358, %v374
    %v383 = vadd.f32 %v372, %v381
    %v384 = vadd.f32 %v373, %v382
    %v385 = vmax.f32 %v383, 1e-15
    %v386 = vmax.f32 %v384, 1e-15
    %v387 = vrcp.pop %v385
    %v388 = vmul.f32 %v385, %v387
    %v389 = vsub.f32 1.0, %v388
    %v390 = vmul.f32 %v387, %v389
    %v391 = vadd.f32 %v387, %v390
    %vm392 = vweird.f32 %v385
    %vm393 = vweird.f32 %v387
    %vm394 = vmor %vm392, %vm393
    %v395 = vsel %vm394, %v387, %v391
    %v396 = vand.u32 2147483647, %v385
    %vm397 = vcmp.eq.f32.partialorder %v396, 8.507059e+37
    %v398 = vand.u32 %v385, 2147483648
    %v399 = vor.u32 1.1754944e-38, %v398
    %v400 = vsel %vm397, %v399, %v395
    %v401 = vrcp.pop %v386
    %v402 = vmul.f32 %v386, %v401
    %v403 = vsub.f32 1.0, %v402
    %v404 = vmul.f32 %v401, %v403
    %v405 = vadd.f32 %v401, %v404
    %vm406 = vweird.f32 %v386
    %vm407 = vweird.f32 %v401
    %vm408 = vmor %vm406, %vm407
    %v409 = vsel %vm408, %v401, %v405
    %v410 = vand.u32 2147483647, %v386
    %vm411 = vcmp.eq.f32.partialorder %v410, 8.507059e+37
    %v412 = vand.u32 %v386, 2147483648
    %v413 = vor.u32 1.1754944e-38, %v412
    %v414 = vsel %vm411, %v413, %v409
    %v415 = vmul.f32 %v377, %v141
    %v416 = vmul.f32 %v378, %v143
    %v417 = vmul.f32 %v379, %v360
    %v418 = vmul.f32 %v380, %v360
    %v419 = vadd.f32 %v415, %v417
    %v420 = vadd.f32 %v416, %v418
    %v421 = vmul.f32 %v419, %v419
    %v422 = vmul.f32 %v420, %v420
    %423 = vadd.xlane.f32.xlu0 %v421
    %v424 = vpop.xlane.xlu0 %423
    %425 = vadd.xlane.f32.xlu0 %v422
    %v426 = vpop.xlane.xlu0 %425
    %v427 = vmul.f32 %v400, %v400
    %v428 = vmul.f32 %v414, %v414
    %v429 = vmul.f32 %v424, %v427
    %v430 = vmul.f32 %v426, %v428
    %v431 = vrsqrt.pop %v429
    %v432 = vmul.f32 %v431, %v429
    %v433 = vmul.f32 %v432, %v431
    %v434 = vmul.f32 0.5, %v433
    %v435 = vsub.f32 1.5, %v434
    %v436 = vmul.f32 %v431, %v435
    %v437 = vmul.f32 %v429, %v436
    %vm438 = vcmp.eq.f32.partialorder %v429, inf
    %v439 = vsel %vm438, %v429, %v437
    %vm440 = vcmp.eq.f32.partialorder %v429, 0.0
    %v441 = vand.u32 %v429, 2147483648
    %v442 = vsel %vm440, %v441, %v439
    %v443 = vrsqrt.pop %v430
    %v444 = vmul.f32 %v443, %v430
    %v445 = vmul.f32 %v444, %v443
    %v446 = vmul.f32 0.5, %v445
    %v447 = vsub.f32 1.5, %v446
    %v448 = vmul.f32 %v443, %v447
    %v449 = vmul.f32 %v430, %v448
    %vm450 = vcmp.eq.f32.partialorder %v430, inf
    %v451 = vsel %vm450, %v430, %v449
    %vm452 = vcmp.eq.f32.partialorder %v430, 0.0
    %v453 = vand.u32 %v430, 2147483648
    %v454 = vsel %vm452, %v453, %v451
    %v455 = vmax.f32 %v442, 1e-15
    %v456 = vmax.f32 %v454, 1e-15
    %v457 = vrcp.pop %v455
    %v458 = vmul.f32 %v455, %v457
    %v459 = vsub.f32 1.0, %v458
    %v460 = vmul.f32 %v457, %v459
    %v461 = vadd.f32 %v457, %v460
    %vm462 = vweird.f32 %v455
    %vm463 = vweird.f32 %v457
    %vm464 = vmor %vm462, %vm463
    %v465 = vsel %vm464, %v457, %v461
    %v466 = vand.u32 2147483647, %v455
    %vm467 = vcmp.eq.f32.partialorder %v466, 8.507059e+37
    %v468 = vand.u32 %v455, 2147483648
    %v469 = vor.u32 1.1754944e-38, %v468
    %v470 = vsel %vm467, %v469, %v465
    %v471 = vrcp.pop %v456
    %v472 = vmul.f32 %v456, %v471
    %v473 = vsub.f32 1.0, %v472
    %v474 = vmul.f32 %v471, %v473
    %v475 = vadd.f32 %v471, %v474
    %vm476 = vweird.f32 %v456
    %vm477 = vweird.f32 %v471
    %vm478 = vmor %vm476, %vm477
    %v479 = vsel %vm478, %v471, %v475
    %v480 = vand.u32 2147483647, %v456
    %vm481 = vcmp.eq.f32.partialorder %v480, 8.507059e+37
    %v482 = vand.u32 %v456, 2147483648
    %v483 = vor.u32 1.1754944e-38, %v482
    %v484 = vsel %vm481, %v483, %v479
    %v485 = vmul.f32 %v470, 0.999
    %v486 = vmul.f32 %v484, 0.999
    %v487 = vmin.f32 %v485, 1.0
    %v488 = vmin.f32 %v486, 1.0
    %v489 = vmul.f32 %v400, %v487
    %v490 = vmul.f32 %v414, %v488
    %v491 = vmul.f32 %v419, %v489
    %v492 = vmul.f32 %v420, %v490
    %493 = vst [vmem:[#allocation8] sm:$0xff] %v491
    %494 = vst [vmem:[#allocation8 + $0x8] sm:$0xff] %v492
    // Predicated region
    $region26: #{tpu_custom_call.1} parent=1 // pred_check
      _
    $region27: #{tpu_custom_call.1} parent=1 // pred_check_branch
      %496 = sbr.rel (0) target = $region29
    $region28: #{tpu_custom_call.1} parent=1 // pred_region
      %498 = vsyncadd [#allocation5], 0
      %s499 = sshll.u32 [#allocation8], 4
      %s500 = int_to_ptr.vmem [resolvable:$true] %s499
      %s501 = sshll.u32 %s4, 4
      %s502 = int_to_ptr.hbm [resolvable:$true] %s501
      %507 = dma.vmem_to_hbm [thread:$0]  %s500, 256, %s502, [#allocation5], 128, 128, 8
    $region29: #{tpu_custom_call.1} parent=1 // pred_fallthru
      _
    // Predicated region
    $region30: #{tpu_custom_call.1} parent=1 // pred_check
      _
    $region31: #{tpu_custom_call.1} parent=1 // pred_check_branch
      %509 = sbr.rel (0) target = $region33
    $region32: #{tpu_custom_call.1} parent=1 // pred_region
      %511 = dma.done [#allocation5], 256
    $region33: #{tpu_custom_call.1} parent=1 // pred_fallthru
      _
    %512 = vsyncpa [#allocation4], 1
    %513 = vsyncpa [#allocation7], 1
    %514 = vsyncpa [#allocation5], 1

// kernel: tpu_custom_call.1
$region0: #{tpu_custom_call.1}
  #allocation0 [shape = 'u32[]', space=smem, size = 0x4, offset = 0x4, fixed_abs, tag = 'smem constant byte address 0x4 - core index']
  #allocation1 [shape = 'u32[72,128]{1,0:T(1,128)}', space=vmem, size = 0x9000, scoped, tag = 'internal scratch']
  #allocation2 [shape = 'f32[1,1]{1,0:T(1,128)S(6)}', space=smem, size = 0x200, scoped, tag = 'scoped memory for tpu_custom_call.1']
  %s0 = inlined_call_operand.hbm [shape: bf16[16,128], index: 0, kind: input, shape index: {}]
  %s1 = inlined_call_operand.hbm [shape: bf16[128,128], index: 1, kind: input, shape index: {}]
  %s2 = inlined_call_operand.vmem [shape: f32[1,128], index: 2, kind: input, shape index: {}]
  %s3 = inlined_call_operand.<no memory space> [shape: f32[1,1], index: 3, kind: input, shape index: {}]
  %s4 = inlined_call_operand.hbm [shape: f32[16,128], index: 4, kind: output, shape index: {}]
  %s5 = sld [smem:[#allocation0]]
  $region34: #{tpu_custom_call.1} parent=0
    _
  %s7 = ssub.s32 1, %s5
  %s8 = scalar_select 0, %s7, %s5
  %9 = sst [smem:[#allocation2]] %s3
  $region1: #{tpu_custom_call.1} parent=0
    #allocation3 [shape = 'u8[4096]{0}', space=vmem, size = 0x1000, scoped, tag = 'input window, operand 0, single buffered']
    #allocation4 [shape = 's32[1]{0}', space=sflag, size = 0x4, scoped, tag = 'scoped memory for tpu_custom_call.1']
    #allocation5 [shape = 's32[1]{0}', space=sflag, size = 0x4, scoped, tag = 'scoped memory for tpu_custom_call.1']
    #allocation6 [shape = 'u8[32768]{0}', space=vmem, size = 0x8000, scoped, tag = 'input window, operand 1, single buffered']
    #allocation7 [shape = 's32[1]{0}', space=sflag, size = 0x4, scoped, tag = 'scoped memory for tpu_custom_call.1']
    #allocation8 [shape = 'u8[8192]{0}', space=vmem, size = 0x2000, scoped, tag = 'output window, operand 0, single buffered']
    %10 = vsyncpa [#allocation4], 0
    %11 = vsyncpa [#allocation7], 0
    %12 = vsyncpa [#allocation5], 0
    // Predicated region
    $region2: #{tpu_custom_call.1} parent=1 // pred_check
      _
    $region3: #{tpu_custom_call.1} parent=1 // pred_check_branch
      %14 = sbr.rel (0) target = $region5
    $region4: #{tpu_custom_call.1} parent=1 // pred_region
      %16 = vsyncadd [#allocation4], 0
      %s17 = sshll.u32 %s0, 4
      %s18 = int_to_ptr.hbm [resolvable:$true] %s17
      %s19 = sshll.u32 [#allocation3], 4
      %s20 = int_to_ptr.vmem [resolvable:$true] %s19
      %25 = dma.hbm_to_vmem [thread:$0]  %s18, 128, %s20, [#allocation4], 64, 64, 4
    $region5: #{tpu_custom_call.1} parent=1 // pred_fallthru
      _
    // Predicated region
    $region6: #{tpu_custom_call.1} parent=1 // pred_check
      _
    $region7: #{tpu_custom_call.1} parent=1 // pred_check_branch
      %27 = sbr.rel (0) target = $region9
    $region8: #{tpu_custom_call.1} parent=1 // pred_region
      %29 = vsyncadd [#allocation7], 0
      %s30 = sshll.u32 %s1, 4
      %s31 = int_to_ptr.hbm [resolvable:$true] %s30
      %s32 = sshll.u32 [#allocation6], 4
      %s33 = int_to_ptr.vmem [resolvable:$true] %s32
      %38 = dma.hbm_to_vmem [thread:$0]  %s31, 1024, %s33, [#allocation7], 64, 64, 4
    $region9: #{tpu_custom_call.1} parent=1 // pred_fallthru
      _
    // Predicated region
    $region10: #{tpu_custom_call.1} parent=1 // pred_check
      _
    $region11: #{tpu_custom_call.1} parent=1 // pred_check_branch
      %40 = sbr.rel (0) target = $region13
    $region12: #{tpu_custom_call.1} parent=1 // pred_region
      _
    $region13: #{tpu_custom_call.1} parent=1 // pred_fallthru
      _
    // Predicated region
    $region14: #{tpu_custom_call.1} parent=1 // pred_check
      _
    $region15: #{tpu_custom_call.1} parent=1 // pred_check_branch
      %42 = sbr.rel (0) target = $region17
    $region16: #{tpu_custom_call.1} parent=1 // pred_region
      _
    $region17: #{tpu_custom_call.1} parent=1 // pred_fallthru
      _
    // Predicated region
    $region18: #{tpu_custom_call.1} parent=1 // pred_check
      _
    $region19: #{tpu_custom_call.1} parent=1 // pred_check_branch
      %44 = sbr.rel (0) target = $region21
    $region20: #{tpu_custom_call.1} parent=1 // pred_region
      %46 = dma.done [#allocation4], 128
    $region21: #{tpu_custom_call.1} parent=1 // pred_fallthru
      _
    // Predicated region
    $region22: #{tpu_custom_call.1} parent=1 // pred_check
      _
    $region23: #{tpu_custom_call.1} parent=1 // pred_check_branch
      %48 = sbr.rel (0) target = $region25
    $region24: #{tpu_custom_call.1} parent=1 // pred_region
      %50 = dma.done [#allocation7], 1024
    $region25: #{tpu_custom_call.1} parent=1 // pred_fallthru
      _
    %v51 = vld [vmem:[#allocation3] sm:$0xf]
    %v52 = vld [vmem:[#allocation3 + $0x4] sm:$0xf]
    %v53 = vunpack.c.l.bf16 %v51
    %v54 = vunpack.c.l.bf16 %v52
    %v55 = vmul.f32 %v53, %v53
    %v56 = vmul.f32 %v54, %v54
    %57 = vadd.xlane.f32.xlu0 %v55
    %v58 = vpop.xlane.xlu0 %57
    %59 = vadd.xlane.f32.xlu0 %v56
    %v60 = vpop.xlane.xlu0 %59
    %v61 = vld [vmem:[#allocation6] sm:$0xf]
    %v62 = vld [vmem:[#allocation6 + $0x4] sm:$0xf]
    %v63 = vld [vmem:[#allocation6 + $0x8] sm:$0xf]
    %v64 = vld [vmem:[#allocation6 + $0xc] sm:$0xf]
    %v65 = vld [vmem:[#allocation6 + $0x10] sm:$0xf]
    %v66 = vld [vmem:[#allocation6 + $0x14] sm:$0xf]
    %v67 = vld [vmem:[#allocation6 + $0x18] sm:$0xf]
    %v68 = vld [vmem:[#allocation6 + $0x1c] sm:$0xf]
    %v69 = vld [vmem:[#allocation6 + $0x20] sm:$0xf]
    %v70 = vld [vmem:[#allocation6 + $0x24] sm:$0xf]
    %v71 = vld [vmem:[#allocation6 + $0x28] sm:$0xf]
    %v72 = vld [vmem:[#allocation6 + $0x2c] sm:$0xf]
    %v73 = vld [vmem:[#allocation6 + $0x30] sm:$0xf]
    %v74 = vld [vmem:[#allocation6 + $0x34] sm:$0xf]
    %v75 = vld [vmem:[#allocation6 + $0x38] sm:$0xf]
    %v76 = vld [vmem:[#allocation6 + $0x3c] sm:$0xf]
    %v79 = vunpack.c.l.b16 %v51
    %v80 = vunpack.c.l.b16 %v52
    %v81 = vpack.c.b16 %v80, %v79
    %v99 = vunpack.c.l.b16 %v61
    %v100 = vunpack.c.l.b16 %v62
    %v101 = vunpack.c.l.b16 %v63
    %v102 = vunpack.c.l.b16 %v64
    %v103 = vunpack.c.l.b16 %v65
    %v104 = vunpack.c.l.b16 %v66
    %v105 = vunpack.c.l.b16 %v67
    %v106 = vunpack.c.l.b16 %v68
    %v107 = vunpack.c.l.b16 %v69
    %v108 = vunpack.c.l.b16 %v70
    %v109 = vunpack.c.l.b16 %v71
    %v110 = vunpack.c.l.b16 %v72
    %v111 = vunpack.c.l.b16 %v73
    %v112 = vunpack.c.l.b16 %v74
    %v113 = vunpack.c.l.b16 %v75
    %v114 = vunpack.c.l.b16 %v76
    %v115 = vpack.c.b16 %v100, %v99
    %v116 = vpack.c.b16 %v102, %v101
    %v117 = vpack.c.b16 %v104, %v103
    %v118 = vpack.c.b16 %v106, %v105
    %v119 = vpack.c.b16 %v108, %v107
    %v120 = vpack.c.b16 %v110, %v109
    %v121 = vpack.c.b16 %v112, %v111
    %v122 = vpack.c.b16 %v114, %v113
    %131 = vmatpush.bf16.msra.mxu0 %v122
    %132 = vmatpush.bf16.msra.mxu0 %v121
    %133 = vmatpush.bf16.msra.mxu0 %v120
    %134 = vmatpush.bf16.msra.mxu0 %v119
    %135 = vmatpush.bf16.msra.mxu0 %v118
    %136 = vmatpush.bf16.msra.mxu0 %v117
    %137 = vmatpush.bf16.msra.mxu0 %v116
    %138 = vmatpush.bf16.msra.mxu0 %v115
    %139 = vmatmul.bf16.gmra.mxu0 %v81
    %v140 = vpop.f32.mrf.mxu0
    %v141 = vadd.f32 0.0, %v140
    %v142 = vpop.f32.mrf.mxu0
    %v143 = vadd.f32 0.0, %v142
    %144 = vdwg.mxu0
    %v145 = vld [vmem:[%s2] sm:$0x1]
    %s146 = sld [smem:[#allocation2]]
    %v147 = vrsqrt.pop %v58
    %v148 = vmul.f32 %v147, %v58
    %v149 = vmul.f32 %v148, %v147
    %v150 = vmul.f32 0.5, %v149
    %v151 = vsub.f32 1.5, %v150
    %v152 = vmul.f32 %v147, %v151
    %v153 = vmul.f32 %v58, %v152
    %vm154 = vcmp.eq.f32.partialorder %v58, inf
    %v155 = vsel %vm154, %v58, %v153
    %vm156 = vcmp.eq.f32.partialorder %v58, 0.0
    %v157 = vand.u32 %v58, 2147483648
    %v158 = vsel %vm156, %v157, %v155
    %v159 = vrsqrt.pop %v60
    %v160 = vmul.f32 %v159, %v60
    %v161 = vmul.f32 %v160, %v159
    %v162 = vmul.f32 0.5, %v161
    %v163 = vsub.f32 1.5, %v162
    %v164 = vmul.f32 %v159, %v163
    %v165 = vmul.f32 %v60, %v164
    %vm166 = vcmp.eq.f32.partialorder %v60, inf
    %v167 = vsel %vm166, %v60, %v165
    %vm168 = vcmp.eq.f32.partialorder %v60, 0.0
    %v169 = vand.u32 %v60, 2147483648
    %v170 = vsel %vm168, %v169, %v167
    %v171 = vmax.f32 %v158, 1e-15
    %v172 = vmax.f32 %v170, 1e-15
    %v173 = vrcp.pop %v171
    %v174 = vmul.f32 %v171, %v173
    %v175 = vsub.f32 1.0, %v174
    %v176 = vmul.f32 %v173, %v175
    %v177 = vadd.f32 %v173, %v176
    %vm178 = vweird.f32 %v171
    %vm179 = vweird.f32 %v173
    %vm180 = vmor %vm178, %vm179
    %v181 = vsel %vm180, %v173, %v177
    %v182 = vand.u32 2147483647, %v171
    %vm183 = vcmp.eq.f32.partialorder %v182, 8.507059e+37
    %v184 = vand.u32 %v171, 2147483648
    %v185 = vor.u32 1.1754944e-38, %v184
    %v186 = vsel %vm183, %v185, %v181
    %v187 = vrcp.pop %v172
    %v188 = vmul.f32 %v172, %v187
    %v189 = vsub.f32 1.0, %v188
    %v190 = vmul.f32 %v187, %v189
    %v191 = vadd.f32 %v187, %v190
    %vm192 = vweird.f32 %v172
    %vm193 = vweird.f32 %v187
    %vm194 = vmor %vm192, %vm193
    %v195 = vsel %vm194, %v187, %v191
    %v196 = vand.u32 2147483647, %v172
    %vm197 = vcmp.eq.f32.partialorder %v196, 8.507059e+37
    %v198 = vand.u32 %v172, 2147483648
    %v199 = vor.u32 1.1754944e-38, %v198
    %v200 = vsel %vm197, %v199, %v195
    %v201 = vmul.f32 %v186, 0.999
    %v202 = vmul.f32 %v200, 0.999
    %v203 = vmin.f32 %v201, 1.0
    %v204 = vmin.f32 %v202, 1.0
    %v205 = vmin.f32 %v171, 0.999
    %v206 = vmin.f32 %v172, 0.999
    %v207 = vmul.f32 %v141, %v141
    %v208 = vmul.f32 %v143, %v143
    %209 = vadd.xlane.f32.xlu0 %v207
    %v210 = vpop.xlane.xlu0 %209
    %211 = vadd.xlane.f32.xlu0 %v208
    %v212 = vpop.xlane.xlu0 %211
    %v213 = vrsqrt.pop %v210
    %v214 = vmul.f32 %v213, %v210
    %v215 = vmul.f32 %v214, %v213
    %v216 = vmul.f32 0.5, %v215
    %v217 = vsub.f32 1.5, %v216
    %v218 = vmul.f32 %v213, %v217
    %v219 = vmul.f32 %v210, %v218
    %vm220 = vcmp.eq.f32.partialorder %v210, inf
    %v221 = vsel %vm220, %v210, %v219
    %vm222 = vcmp.eq.f32.partialorder %v210, 0.0
    %v223 = vand.u32 %v210, 2147483648
    %v224 = vsel %vm222, %v223, %v221
    %v225 = vrsqrt.pop %v212
    %v226 = vmul.f32 %v225, %v212
    %v227 = vmul.f32 %v226, %v225
    %v228 = vmul.f32 0.5, %v227
    %v229 = vsub.f32 1.5, %v228
    %v230 = vmul.f32 %v225, %v229
    %v231 = vmul.f32 %v212, %v230
    %vm232 = vcmp.eq.f32.partialorder %v212, inf
    %v233 = vsel %vm232, %v212, %v231
    %vm234 = vcmp.eq.f32.partialorder %v212, 0.0
    %v235 = vand.u32 %v212, 2147483648
    %v236 = vsel %vm234, %v235, %v233
    %v237 = vmul.f32 %v203, %v224
    %v238 = vmul.f32 %v204, %v236
    %v239 = vmax.f32 %v237, 1e-15
    %v240 = vmax.f32 %v238, 1e-15
    %v241 = vmax.f32 %v205, -0.9999999
    %v242 = vmax.f32 %v206, -0.9999999
    %v243 = vmin.f32 %v241, 0.9999999
    %v244 = vmin.f32 %v242, 0.9999999
    %v245 = vadd.f32 %v243, 1.0
    %v246 = vadd.f32 %v244, 1.0
    %v247 = vsub.f32 1.0, %v243
    %v248 = vsub.f32 1.0, %v244
    %v249 = vrcp.pop %v247
    %v250 = vmul.f32 %v247, %v249
    %v251 = vsub.f32 1.0, %v250
    %v252 = vmul.f32 %v249, %v251
    %v253 = vadd.f32 %v249, %v252
    %vm254 = vweird.f32 %v247
    %vm255 = vweird.f32 %v249
    %vm256 = vmor %vm254, %vm255
    %v257 = vsel %vm256, %v249, %v253
    %v258 = vand.u32 2147483647, %v247
    %vm259 = vcmp.eq.f32.partialorder %v258, 8.507059e+37
    %v260 = vand.u32 %v247, 2147483648
    %v261 = vor.u32 1.1754944e-38, %v260
    %v262 = vsel %vm259, %v261, %v257
    %v263 = vmul.f32 %v245, %v262
    %v264 = vrcp.pop %v248
    %v265 = vmul.f32 %v248, %v264
    %v266 = vsub.f32 1.0, %v265
    %v267 = vmul.f32 %v264, %v266
    %v268 = vadd.f32 %v264, %v267
    %vm269 = vweird.f32 %v248
    %vm270 = vweird.f32 %v264
    %vm271 = vmor %vm269, %vm270
    %v272 = vsel %vm271, %v264, %v268
    %v273 = vand.u32 2147483647, %v248
    %vm274 = vcmp.eq.f32.partialorder %v273, 8.507059e+37
    %v275 = vand.u32 %v248, 2147483648
    %v276 = vor.u32 1.1754944e-38, %v275
    %v277 = vsel %vm274, %v276, %v272
    %v278 = vmul.f32 %v246, %v277
    %v279 = vlog2.pop %v263
    %v280 = vmul.f32 %v279, 0.6931472
    %v281 = vlog2.pop %v278
    %v282 = vmul.f32 %v281, 0.6931472
    %v283 = vmul.f32 %v280, 0.5
    %v284 = vmul.f32 %v282, 0.5
    %v285 = vrcp.pop %v205
    %v286 = vmul.f32 %v205, %v285
    %v287 = vsub.f32 1.0, %v286
    %v288 = vmul.f32 %v285, %v287
    %v289 = vadd.f32 %v285, %v288
    %vm290 = vweird.f32 %v205
    %vm291 = vweird.f32 %v285
    %vm292 = vmor %vm290, %vm291
    %v293 = vsel %vm292, %v285, %v289
    %v294 = vand.u32 2147483647, %v205
    %vm295 = vcmp.eq.f32.partialorder %v294, 8.507059e+37
    %v296 = vand.u32 %v205, 2147483648
    %v297 = vor.u32 1.1754944e-38, %v296
    %v298 = vsel %vm295, %v297, %v293
    %v299 = vrcp.pop %v206
    %v300 = vmul.f32 %v206, %v299
    %v301 = vsub.f32 1.0, %v300
    %v302 = vmul.f32 %v299, %v301
    %v303 = vadd.f32 %v299, %v302
    %vm304 = vweird.f32 %v206
    %vm305 = vweird.f32 %v299
    %vm306 = vmor %vm304, %vm305
    %v307 = vsel %vm306, %v299, %v303
    %v308 = vand.u32 2147483647, %v206
    %vm309 = vcmp.eq.f32.partialorder %v308, 8.507059e+37
    %v310 = vand.u32 %v206, 2147483648
    %v311 = vor.u32 1.1754944e-38, %v310
    %v312 = vsel %vm309, %v311, %v307
    %v313 = vmul.f32 %v239, %v298
    %v314 = vmul.f32 %v240, %v312
    %v315 = vmul.f32 %v313, %v283
    %v316 = vmul.f32 %v314, %v284
    %v317 = vtanh.pop %v315
    %v318 = vtanh.pop %v316
    %v319 = vrcp.pop %v239
    %v320 = vmul.f32 %v239, %v319
    %v321 = vsub.f32 1.0, %v320
    %v322 = vmul.f32 %v319, %v321
    %v323 = vadd.f32 %v319, %v322
    %vm324 = vweird.f32 %v239
    %vm325 = vweird.f32 %v319
    %vm326 = vmor %vm324, %vm325
    %v327 = vsel %vm326, %v319, %v323
    %v328 = vand.u32 2147483647, %v239
    %vm329 = vcmp.eq.f32.partialorder %v328, 8.507059e+37
    %v330 = vand.u32 %v239, 2147483648
    %v331 = vor.u32 1.1754944e-38, %v330
    %v332 = vsel %vm329, %v331, %v327
    %v333 = vrcp.pop %v240
    %v334 = vmul.f32 %v240, %v333
    %v335 = vsub.f32 1.0, %v334
    %v336 = vmul.f32 %v333, %v335
    %v337 = vadd.f32 %v333, %v336
    %vm338 = vweird.f32 %v240
    %vm339 = vweird.f32 %v333
    %vm340 = vmor %vm338, %vm339
    %v341 = vsel %vm340, %v333, %v337
    %v342 = vand.u32 2147483647, %v240
    %vm343 = vcmp.eq.f32.partialorder %v342, 8.507059e+37
    %v344 = vand.u32 %v240, 2147483648
    %v345 = vor.u32 1.1754944e-38, %v344
    %v346 = vsel %vm343, %v345, %v341
    %v347 = vmul.f32 %v317, %v332
    %v348 = vmul.f32 %v318, %v346
    %v349 = vmul.f32 %v347, %v203
    %v350 = vmul.f32 %v348, %v204
    %vm351 = vcmp.le.f32.partialorder %v210, 0.0
    %vm352 = vcmp.le.f32.partialorder %v212, 0.0
    %v353 = vsel %vm351, 0.0, %v349
    %v354 = vsel %vm352, 0.0, %v350
    %v355 = vmul.f32 %v353, %v353
    %v356 = vmul.f32 %v354, %v354
    %v357 = vmul.f32 %v355, %v210
    %v358 = vmul.f32 %v356, %v212
    %v360 = vperm.slane %v145, 0
    %v362 = vmul.f32 %v141, %v360
    %v363 = vmul.f32 %v143, %v360
    %364 = vadd.xlane.f32.xlu0 %v362
    %v365 = vpop.xlane.xlu0 %364
    %366 = vadd.xlane.f32.xlu0 %v363
    %v367 = vpop.xlane.xlu0 %366
    %v368 = vmul.f32 %v353, %v365
    %v369 = vmul.f32 %v354, %v367
    %v370 = vmul.f32 %v368, 2.0
    %v371 = vmul.f32 %v369, 2.0
    %v372 = vadd.f32 %v370, 1.0
    %v373 = vadd.f32 %v371, 1.0
    %v374 = vstv %s146
    %v375 = vadd.f32 %v372, %v374
    %v376 = vadd.f32 %v373, %v374
    %v377 = vmul.f32 %v375, %v353
    %v378 = vmul.f32 %v376, %v354
    %v379 = vsub.f32 1.0, %v357
    %v380 = vsub.f32 1.0, %v358
    %v381 = vmul.f32 %v357, %v374
    %v382 = vmul.f32 %v358, %v374
    %v383 = vadd.f32 %v372, %v381
    %v384 = vadd.f32 %v373, %v382
    %v385 = vmax.f32 %v383, 1e-15
    %v386 = vmax.f32 %v384, 1e-15
    %v387 = vrcp.pop %v385
    %v388 = vmul.f32 %v385, %v387
    %v389 = vsub.f32 1.0, %v388
    %v390 = vmul.f32 %v387, %v389
    %v391 = vadd.f32 %v387, %v390
    %vm392 = vweird.f32 %v385
    %vm393 = vweird.f32 %v387
    %vm394 = vmor %vm392, %vm393
    %v395 = vsel %vm394, %v387, %v391
    %v396 = vand.u32 2147483647, %v385
    %vm397 = vcmp.eq.f32.partialorder %v396, 8.507059e+37
    %v398 = vand.u32 %v385, 2147483648
    %v399 = vor.u32 1.1754944e-38, %v398
    %v400 = vsel %vm397, %v399, %v395
    %v401 = vrcp.pop %v386
    %v402 = vmul.f32 %v386, %v401
    %v403 = vsub.f32 1.0, %v402
    %v404 = vmul.f32 %v401, %v403
    %v405 = vadd.f32 %v401, %v404
    %vm406 = vweird.f32 %v386
    %vm407 = vweird.f32 %v401
    %vm408 = vmor %vm406, %vm407
    %v409 = vsel %vm408, %v401, %v405
    %v410 = vand.u32 2147483647, %v386
    %vm411 = vcmp.eq.f32.partialorder %v410, 8.507059e+37
    %v412 = vand.u32 %v386, 2147483648
    %v413 = vor.u32 1.1754944e-38, %v412
    %v414 = vsel %vm411, %v413, %v409
    %v415 = vmul.f32 %v377, %v141
    %v416 = vmul.f32 %v378, %v143
    %v417 = vmul.f32 %v379, %v360
    %v418 = vmul.f32 %v380, %v360
    %v419 = vadd.f32 %v415, %v417
    %v420 = vadd.f32 %v416, %v418
    %v421 = vmul.f32 %v419, %v419
    %v422 = vmul.f32 %v420, %v420
    %423 = vadd.xlane.f32.xlu0 %v421
    %v424 = vpop.xlane.xlu0 %423
    %425 = vadd.xlane.f32.xlu0 %v422
    %v426 = vpop.xlane.xlu0 %425
    %v427 = vmul.f32 %v400, %v400
    %v428 = vmul.f32 %v414, %v414
    %v429 = vmul.f32 %v424, %v427
    %v430 = vmul.f32 %v426, %v428
    %v431 = vrsqrt.pop %v429
    %v432 = vmul.f32 %v431, %v429
    %v433 = vmul.f32 %v432, %v431
    %v434 = vmul.f32 0.5, %v433
    %v435 = vsub.f32 1.5, %v434
    %v436 = vmul.f32 %v431, %v435
    %v437 = vmul.f32 %v429, %v436
    %vm438 = vcmp.eq.f32.partialorder %v429, inf
    %v439 = vsel %vm438, %v429, %v437
    %vm440 = vcmp.eq.f32.partialorder %v429, 0.0
    %v441 = vand.u32 %v429, 2147483648
    %v442 = vsel %vm440, %v441, %v439
    %v443 = vrsqrt.pop %v430
    %v444 = vmul.f32 %v443, %v430
    %v445 = vmul.f32 %v444, %v443
    %v446 = vmul.f32 0.5, %v445
    %v447 = vsub.f32 1.5, %v446
    %v448 = vmul.f32 %v443, %v447
    %v449 = vmul.f32 %v430, %v448
    %vm450 = vcmp.eq.f32.partialorder %v430, inf
    %v451 = vsel %vm450, %v430, %v449
    %vm452 = vcmp.eq.f32.partialorder %v430, 0.0
    %v453 = vand.u32 %v430, 2147483648
    %v454 = vsel %vm452, %v453, %v451
    %v455 = vmax.f32 %v442, 1e-15
    %v456 = vmax.f32 %v454, 1e-15
    %v457 = vrcp.pop %v455
    %v458 = vmul.f32 %v455, %v457
    %v459 = vsub.f32 1.0, %v458
    %v460 = vmul.f32 %v457, %v459
    %v461 = vadd.f32 %v457, %v460
    %vm462 = vweird.f32 %v455
    %vm463 = vweird.f32 %v457
    %vm464 = vmor %vm462, %vm463
    %v465 = vsel %vm464, %v457, %v461
    %v466 = vand.u32 2147483647, %v455
    %vm467 = vcmp.eq.f32.partialorder %v466, 8.507059e+37
    %v468 = vand.u32 %v455, 2147483648
    %v469 = vor.u32 1.1754944e-38, %v468
    %v470 = vsel %vm467, %v469, %v465
    %v471 = vrcp.pop %v456
    %v472 = vmul.f32 %v456, %v471
    %v473 = vsub.f32 1.0, %v472
    %v474 = vmul.f32 %v471, %v473
    %v475 = vadd.f32 %v471, %v474
    %vm476 = vweird.f32 %v456
    %vm477 = vweird.f32 %v471
    %vm478 = vmor %vm476, %vm477
    %v479 = vsel %vm478, %v471, %v475
    %v480 = vand.u32 2147483647, %v456
    %vm481 = vcmp.eq.f32.partialorder %v480, 8.507059e+37
    %v482 = vand.u32 %v456, 2147483648
    %v483 = vor.u32 1.1754944e-38, %v482
    %v484 = vsel %vm481, %v483, %v479
    %v485 = vmul.f32 %v470, 0.999
    %v486 = vmul.f32 %v484, 0.999
    %v487 = vmin.f32 %v485, 1.0
    %v488 = vmin.f32 %v486, 1.0
    %v489 = vmul.f32 %v400, %v487
    %v490 = vmul.f32 %v414, %v488
    %v491 = vmul.f32 %v419, %v489
    %v492 = vmul.f32 %v420, %v490
    %493 = vst [vmem:[#allocation8] sm:$0xff] %v491
    %494 = vst [vmem:[#allocation8 + $0x8] sm:$0xff] %v492
    // Predicated region
    $region26: #{tpu_custom_call.1} parent=1 // pred_check
      _
    $region27: #{tpu_custom_call.1} parent=1 // pred_check_branch
      %496 = sbr.rel (0) target = $region29
    $region28: #{tpu_custom_call.1} parent=1 // pred_region
      %498 = vsyncadd [#allocation5], 0
      %s499 = sshll.u32 [#allocation8], 4
      %s500 = int_to_ptr.vmem [resolvable:$true] %s499
      %s501 = sshll.u32 %s4, 4
      %s502 = int_to_ptr.hbm [resolvable:$true] %s501
      %507 = dma.vmem_to_hbm [thread:$0]  %s500, 256, %s502, [#allocation5], 128, 128, 8
    $region29: #{tpu_custom_call.1} parent=1 // pred_fallthru
      _
    // Predicated region
    $region30: #{tpu_custom_call.1} parent=1 // pred_check
      _
    $region31: #{tpu_custom_call.1} parent=1 // pred_check_branch
      %509 = sbr.rel (0) target = $region33
    $region32: #{tpu_custom_call.1} parent=1 // pred_region
      %511 = dma.done [#allocation5], 256
    $region33: #{tpu_custom_call.1} parent=1 // pred_fallthru
      _
    %512 = vsyncpa [#allocation4], 1
    %513 = vsyncpa [#allocation7], 1
    %514 = vsyncpa [#allocation5], 1

</llo_original>
